<compile_context>
chip_gen: v5e
topology: v5e:2x2
jax: 0.10.0
libtpu: 0.0.40
codegen_flags: <defaults>
</compile_context>

<pallas_src>
import functools

import jax
import jax.numpy as jnp
from jax import lax
from jax.experimental import pallas as pl
from jax.experimental.pallas import tpu as pltpu

KSIZE = 7            # spatial-attention conv kernel size
PAD = KSIZE // 2     # 'same' padding


def _cbam_kernel(x_ref, w1_ref, w2_ref, masks_ref, wsp_ref, o_ref, *, w, hw):
    """One batch block per grid step.

    x_ref    : VMEM (nb, C, HWp)        input (any float dtype)
    w1_ref   : VMEM (Cr, C)  f32        channel-attention fc1 weight
    w2_ref   : VMEM (C, Cr)  f32        channel-attention fc2 weight
    masks_ref: VMEM (2*K, HWp) f32      [K horizontal | K vertical] 0/1 validity masks
    wsp_ref  : SMEM (2*K*K,) f32        spatial conv weight, flattened (c, ky, kx)
    o_ref    : VMEM (nb, C, HWp)        output (same dtype as input)
    """
    nb, c_dim, hwp = x_ref.shape
    x = x_ref[...].astype(jnp.float32)                     # compute in f32 (v5e-safe)

    # ---------------- Channel attention ----------------
    if hwp == hw:
        ch_avg = jnp.mean(x, axis=-1)                      # (nb, C)  lane reduce
        ch_max = jnp.max(x, axis=-1)
    else:
        # Lane-padded: zeros don't change the sum; mask them out of the max.
        ch_avg = jnp.sum(x, axis=-1) * (1.0 / hw)
        lane_valid = lax.broadcasted_iota(jnp.int32, (1, 1, hwp), 2) < hw
        ch_max = jnp.max(jnp.where(lane_valid, x, -jnp.inf), axis=-1)

    w1 = w1_ref[...]                                       # (Cr, C)
    w2 = w2_ref[...]                                       # (C, Cr)
    if c_dim >= 128:
        # Production channel counts: skinny contractions on the (otherwise idle) MXU.
        dims = (((1,), (1,)), ((), ()))
        a1 = lax.dot_general(ch_avg, w1, dims, preferred_element_type=jnp.float32)
        m1 = lax.dot_general(ch_max, w1, dims, preferred_element_type=jnp.float32)
        hidden = jnp.maximum(a1 + m1, 0.0)
        logits = lax.dot_general(hidden, w2, dims, preferred_element_type=jnp.float32)
    else:
        # Tiny C (test case): broadcast-multiply + lane reduce on the VPU.
        a1 = jnp.sum(ch_avg[:, None, :] * w1[None, :, :], axis=-1)      # (nb, Cr)
        m1 = jnp.sum(ch_max[:, None, :] * w1[None, :, :], axis=-1)
        hidden = jnp.maximum(a1 + m1, 0.0)
        logits = jnp.sum(hidden[:, None, :] * w2[None, :, :], axis=-1)  # (nb, C)
    ca = jax.nn.sigmoid(logits)                            # (nb, C)
    y = x * ca[:, :, None]                                 # (nb, C, HWp)

    # ---------------- Spatial attention ----------------
    sp_avg = jnp.mean(y, axis=1)                           # (nb, HWp) cross-channel
    sp_max = jnp.max(y, axis=1)

    masks = masks_ref[...]                                 # (2K, HWp) f32 0/1
    mask_h = [masks[dx:dx + 1, :] for dx in range(KSIZE)]  # (1, HWp) each
    mask_v = [masks[KSIZE + dy:KSIZE + dy + 1, :] for dy in range(KSIZE)]

    # Separable 7x7 'same' conv via in-register lane rotations + boundary masks.
    # rolled[p] = pooled[p + (dx - PAD)] for valid taps; masks zero everything else,
    # so circular wrap-around values are never consumed.
    accs = []
    for c, pooled in enumerate((sp_avg, sp_max)):
        hs = []
        for dx in range(KSIZE):
            sh = (PAD - dx) % hwp
            v = pooled if sh == 0 else pltpu.roll(pooled, shift=sh, axis=1)
            hs.append(v * mask_h[dx])                      # horizontal taps (7 per map)
        acc = None
        for dy in range(KSIZE):
            base = c * KSIZE * KSIZE + dy * KSIZE
            inner = hs[0] * wsp_ref[base]
            for dx in range(1, KSIZE):
                inner = inner + hs[dx] * wsp_ref[base + dx]
            sh = ((PAD - dy) * w) % hwp
            vv = inner if sh == 0 else pltpu.roll(inner, shift=sh, axis=1)
            term = vv * mask_v[dy]
            acc = term if acc is None else acc + term
        accs.append(acc)                                   # two independent FMA chains
    attn = jax.nn.sigmoid(accs[0] + accs[1])               # (nb, HWp)

    o_ref[...] = (y * attn[:, None, :]).astype(o_ref.dtype)   # lane-dense store


def _vmem_limit_bytes():
    """Per-generation VMEM limit: ~96 MiB on v5e/v6e (128 MiB), ~48 MiB on v7x (64 MiB)."""
    phys = 64 * 1024 * 1024                               # conservative default (v7x)
    try:
        info = pltpu.get_tpu_info()
        phys = int(getattr(info, "vmem_capacity_bytes", phys)) or phys
    except Exception:
        pass
    return max(32 * 1024 * 1024, min((phys * 3) // 4, 100 * 1024 * 1024))


def cbam_forward(x, w1, w2, w_spatial):
    """x: (N, C, H, W); w1: (Cr, C, 1, 1); w2: (C, Cr, 1, 1); w_spatial: (1, 2, K, K)."""
    N, C, H, W = x.shape
    HW = H * W
    HWp = ((HW + 127) // 128) * 128                       # lane dim -> multiple of 128
    Cr = w1.shape[0]

    x_flat = x.reshape(N, C, HW)                          # free bitcast in XLA
    if HWp != HW:
        x_flat = jnp.pad(x_flat, ((0, 0), (0, 0), (0, HWp - HW)))
    w1_2d = w1.reshape(Cr, C).astype(jnp.float32)
    w2_2d = w2.reshape(C, Cr).astype(jnp.float32)
    wsp = w_spatial.reshape(-1).astype(jnp.float32)       # (2*K*K,)

    # Precomputed 0/1 boundary masks (shared by every grid step; no in-kernel div/mod).
    pos = jnp.arange(HWp, dtype=jnp.int32)
    col = pos % W
    row = pos // W
    mh = [((col + (dx - PAD)) >= 0) & ((col + (dx - PAD)) < W) for dx in range(KSIZE)]
    mv = [((row + (dy - PAD)) >= 0) & ((row + (dy - PAD)) < H) for dy in range(KSIZE)]
    masks = jnp.stack(mh + mv, axis=0).astype(jnp.float32)   # (2*K, HWp)

    # Batch block size from the real live-buffer footprint vs. the VMEM limit.
    vmem_limit = _vmem_limit_bytes()
    io_bytes = x.dtype.itemsize
    per_n = C * HWp * (2 * io_bytes + 2 * io_bytes + 8)   # 2x in + 2x out blocks + x/y f32
    per_n += 24 * HWp * 4                                 # spatial-attention intermediates
    budget = (vmem_limit * 6) // 10                       # headroom for compiler scratch
    nb = max(1, min(N, budget // per_n))
    if N >= 2:
        nb = min(nb, pl.cdiv(N, 2))   # >=2 grid steps: feeds both TCs on v7x megacore
    grid = (pl.cdiv(N, nb),)

    grid_spec = pltpu.PrefetchScalarGridSpec(
        num_scalar_prefetch=0,
        grid=grid,
        in_specs=[
            pl.BlockSpec((nb, C, HWp), lambda n: (n, 0, 0)),
            pl.BlockSpec((Cr, C), lambda n: (0, 0)),
            pl.BlockSpec((C, Cr), lambda n: (0, 0)),
            pl.BlockSpec((2 * KSIZE, HWp), lambda n: (0, 0)),
            pl.BlockSpec(memory_space=pltpu.MemorySpace.SMEM),
        ],
        out_specs=pl.BlockSpec((nb, C, HWp), lambda n: (n, 0, 0)),
    )

    out_flat = pl.pallas_call(
        functools.partial(_cbam_kernel, w=W, hw=HW),
        out_shape=jax.ShapeDtypeStruct((N, C, HWp), x.dtype),
        grid_spec=grid_spec,
        compiler_params=pltpu.CompilerParams(
            dimension_semantics=("parallel",),
            vmem_limit_bytes=vmem_limit),
    )(x_flat, w1_2d, w2_2d, masks, wsp)

    if HWp != HW:
        out_flat = out_flat[:, :, :HW]
    return out_flat.reshape(N, C, H, W)


def cbam_reference(x, w1, w2, w_spatial):
    """Pure-JAX reference matching the PyTorch CBAM forward."""
    dn = ("NCHW", "OIHW", "NCHW")
    hp = lax.Precision.HIGHEST

    def conv(t, w_, padding):
        return lax.conv_general_dilated(t, w_, (1, 1), padding,
                                        dimension_numbers=dn, precision=hp)

    # Channel attention: sigmoid(fc2(relu(fc1(avg) + fc1(max)))) * x
    avg = jnp.mean(x, axis=(2, 3), keepdims=True)
    mx = jnp.max(x, axis=(2, 3), keepdims=True)
    hidden = jax.nn.relu(conv(avg, w1, "VALID") + conv(mx, w1, "VALID"))
    ca = jax.nn.sigmoid(conv(hidden, w2, "VALID"))
    y = ca * x
    # Spatial attention.
    sp_avg = jnp.mean(y, axis=1, keepdims=True)
    sp_max = jnp.max(y, axis=1, keepdims=True)
    pool = jnp.concatenate([sp_avg, sp_max], axis=1)
    conv_out = conv(pool, w_spatial, [(PAD, PAD), (PAD, PAD)])
    return jax.nn.sigmoid(conv_out) * y


if __name__ == "__main__":
    key = jax.random.PRNGKey(0)
    k1, k2, k3, k4 = jax.random.split(key, 4)

    N, C, H, W = 2, 32, 16, 16
    reduction = 16
    Cr = C // reduction

    x = jax.random.normal(k1, (N, C, H, W), dtype=jnp.float32)
    w1 = jax.random.normal(k2, (Cr, C, 1, 1), dtype=jnp.float32) * 0.1
    w2 = jax.random.normal(k3, (C, Cr, 1, 1), dtype=jnp.float32) * 0.1
    w_spatial = jax.random.normal(k4, (1, 2, KSIZE, KSIZE), dtype=jnp.float32) * 0.1

    out = jax.block_until_ready(cbam_forward(x, w1, w2, w_spatial))
    ref = cbam_reference(x, w1, w2, w_spatial)

    assert out.shape == (N, C, H, W) and out.dtype == x.dtype
    assert jnp.allclose(out, ref, atol=2e-4, rtol=2e-4), "mismatch vs reference"

    print("KERNEL_OK")
</pallas_src>

<mosaic_0001>
module attributes {stable_mosaic.version = 11 : i64} {
  func.func @_cbam_kernel(%arg0: i32, %arg1: memref<1x32x256xf32, #tpu.memory_space<vmem>>, %arg2: memref<2x32xf32, #tpu.memory_space<vmem>>, %arg3: memref<32x2xf32, #tpu.memory_space<vmem>>, %arg4: memref<14x256xf32, #tpu.memory_space<vmem>>, %arg5: memref<98xf32, #tpu.memory_space<smem>>, %arg6: memref<1x32x256xf32, #tpu.memory_space<vmem>>) attributes {dimension_semantics = [#tpu.dimension_semantics<parallel>], iteration_bounds = array<i64: 2>, scalar_prefetch = 0 : i64, scratch_operands = 0 : i64, tpu.core_type = #tpu.core_type<tc>, window_params = [{transform_indices = @transform_0, window_bounds = array<i64: 1, 32, 256>}, {pipeline_mode = #tpu.pipeline_mode<synchronous>, transform_indices = @transform_1, window_bounds = array<i64: 2, 32>}, {pipeline_mode = #tpu.pipeline_mode<synchronous>, transform_indices = @transform_2, window_bounds = array<i64: 32, 2>}, {pipeline_mode = #tpu.pipeline_mode<synchronous>, transform_indices = @transform_3, window_bounds = array<i64: 14, 256>}, {transform_indices = @transform_4, window_bounds = array<i64: 98>}, {transform_indices = @transform_5, window_bounds = array<i64: 1, 32, 256>}]} {
    %c0 = arith.constant 0 : index
    %c0_0 = arith.constant 0 : index
    %c0_1 = arith.constant 0 : index
    %0 = vector.load %arg1[%c0, %c0_0, %c0_1] : memref<1x32x256xf32, #tpu.memory_space<vmem>>, vector<1x32x256xf32>
    %cst = arith.constant dense<0.000000e+00> : vector<1x32xf32>
    %1 = vector.multi_reduction <add>, %0, %cst [2] : vector<1x32x256xf32> to vector<1x32xf32>
    %cst_2 = arith.constant 2.560000e+02 : f32
    %2 = vector.broadcast %cst_2 : f32 to vector<1x32xf32>
    %3 = arith.divf %1, %2 : vector<1x32xf32>
    %cst_3 = arith.constant dense<0xFF800000> : vector<1x32xf32>
    %4 = vector.multi_reduction <maximumf>, %0, %cst_3 [2] : vector<1x32x256xf32> to vector<1x32xf32>
    %c0_4 = arith.constant 0 : index
    %c0_5 = arith.constant 0 : index
    %5 = vector.load %arg2[%c0_4, %c0_5] : memref<2x32xf32, #tpu.memory_space<vmem>>, vector<2x32xf32>
    %c0_6 = arith.constant 0 : index
    %c0_7 = arith.constant 0 : index
    %6 = vector.load %arg3[%c0_6, %c0_7] : memref<32x2xf32, #tpu.memory_space<vmem>>, vector<32x2xf32>
    %7 = vector.shape_cast %3 : vector<1x32xf32> to vector<1x1x32xf32>
    %8 = vector.shape_cast %5 : vector<2x32xf32> to vector<1x2x32xf32>
    %9 = vector.broadcast %7 : vector<1x1x32xf32> to vector<1x2x32xf32>
    %10 = arith.mulf %9, %8 : vector<1x2x32xf32>
    %cst_8 = arith.constant dense<0.000000e+00> : vector<1x2xf32>
    %11 = vector.multi_reduction <add>, %10, %cst_8 [2] : vector<1x2x32xf32> to vector<1x2xf32>
    %12 = vector.shape_cast %4 : vector<1x32xf32> to vector<1x1x32xf32>
    %13 = vector.shape_cast %5 : vector<2x32xf32> to vector<1x2x32xf32>
    %14 = vector.broadcast %12 : vector<1x1x32xf32> to vector<1x2x32xf32>
    %15 = arith.mulf %14, %13 : vector<1x2x32xf32>
    %cst_9 = arith.constant dense<0.000000e+00> : vector<1x2xf32>
    %16 = vector.multi_reduction <add>, %15, %cst_9 [2] : vector<1x2x32xf32> to vector<1x2xf32>
    %17 = arith.addf %11, %16 : vector<1x2xf32>
    %cst_10 = arith.constant 0.000000e+00 : f32
    %18 = vector.broadcast %cst_10 : f32 to vector<1x2xf32>
    %19 = arith.maximumf %17, %18 : vector<1x2xf32>
    %20 = vector.shape_cast %19 : vector<1x2xf32> to vector<1x1x2xf32>
    %21 = vector.shape_cast %6 : vector<32x2xf32> to vector<1x32x2xf32>
    %22 = vector.broadcast %20 : vector<1x1x2xf32> to vector<1x32x2xf32>
    %23 = arith.mulf %22, %21 : vector<1x32x2xf32>
    %cst_11 = arith.constant dense<0.000000e+00> : vector<1x32xf32>
    %24 = vector.multi_reduction <add>, %23, %cst_11 [2] : vector<1x32x2xf32> to vector<1x32xf32>
    %25 = arith.negf %24 : vector<1x32xf32>
    %26 = math.exp %25 : vector<1x32xf32>
    %cst_12 = arith.constant 1.000000e+00 : f32
    %27 = vector.broadcast %cst_12 : f32 to vector<1x32xf32>
    %28 = arith.addf %27, %26 : vector<1x32xf32>
    %29 = arith.divf %27, %28 : vector<1x32xf32>
    %30 = vector.shape_cast %29 : vector<1x32xf32> to vector<1x32x1xf32>
    %31 = vector.broadcast %30 : vector<1x32x1xf32> to vector<1x32x256xf32>
    %32 = arith.mulf %0, %31 : vector<1x32x256xf32>
    %cst_13 = arith.constant dense<0.000000e+00> : vector<1x256xf32>
    %33 = vector.multi_reduction <add>, %32, %cst_13 [1] : vector<1x32x256xf32> to vector<1x256xf32>
    %cst_14 = arith.constant 3.200000e+01 : f32
    %34 = vector.broadcast %cst_14 : f32 to vector<1x256xf32>
    %35 = arith.divf %33, %34 : vector<1x256xf32>
    %cst_15 = arith.constant dense<0xFF800000> : vector<1x256xf32>
    %36 = vector.multi_reduction <maximumf>, %32, %cst_15 [1] : vector<1x32x256xf32> to vector<1x256xf32>
    %c0_16 = arith.constant 0 : index
    %c0_17 = arith.constant 0 : index
    %37 = vector.load %arg4[%c0_16, %c0_17] : memref<14x256xf32, #tpu.memory_space<vmem>>, vector<14x256xf32>
    %38 = vector.extract_strided_slice %37 {offsets = [0, 0], sizes = [1, 256], strides = [1, 1]} : vector<14x256xf32> to vector<1x256xf32>
    %39 = vector.extract_strided_slice %37 {offsets = [1, 0], sizes = [1, 256], strides = [1, 1]} : vector<14x256xf32> to vector<1x256xf32>
    %40 = vector.extract_strided_slice %37 {offsets = [2, 0], sizes = [1, 256], strides = [1, 1]} : vector<14x256xf32> to vector<1x256xf32>
    %41 = vector.extract_strided_slice %37 {offsets = [3, 0], sizes = [1, 256], strides = [1, 1]} : vector<14x256xf32> to vector<1x256xf32>
    %42 = vector.extract_strided_slice %37 {offsets = [4, 0], sizes = [1, 256], strides = [1, 1]} : vector<14x256xf32> to vector<1x256xf32>
    %43 = vector.extract_strided_slice %37 {offsets = [5, 0], sizes = [1, 256], strides = [1, 1]} : vector<14x256xf32> to vector<1x256xf32>
    %44 = vector.extract_strided_slice %37 {offsets = [6, 0], sizes = [1, 256], strides = [1, 1]} : vector<14x256xf32> to vector<1x256xf32>
    %45 = vector.extract_strided_slice %37 {offsets = [7, 0], sizes = [1, 256], strides = [1, 1]} : vector<14x256xf32> to vector<1x256xf32>
    %46 = vector.extract_strided_slice %37 {offsets = [8, 0], sizes = [1, 256], strides = [1, 1]} : vector<14x256xf32> to vector<1x256xf32>
    %47 = vector.extract_strided_slice %37 {offsets = [9, 0], sizes = [1, 256], strides = [1, 1]} : vector<14x256xf32> to vector<1x256xf32>
    %48 = vector.extract_strided_slice %37 {offsets = [10, 0], sizes = [1, 256], strides = [1, 1]} : vector<14x256xf32> to vector<1x256xf32>
    %49 = vector.extract_strided_slice %37 {offsets = [11, 0], sizes = [1, 256], strides = [1, 1]} : vector<14x256xf32> to vector<1x256xf32>
    %50 = vector.extract_strided_slice %37 {offsets = [12, 0], sizes = [1, 256], strides = [1, 1]} : vector<14x256xf32> to vector<1x256xf32>
    %51 = vector.extract_strided_slice %37 {offsets = [13, 0], sizes = [1, 256], strides = [1, 1]} : vector<14x256xf32> to vector<1x256xf32>
    %c3_i32 = arith.constant 3 : i32
    %52 = tpu.dynamic_rotate %35 by %c3_i32 dim 1 : vector<1x256xf32>, i32 -> vector<1x256xf32>
    %53 = arith.mulf %52, %38 : vector<1x256xf32>
    %c2_i32 = arith.constant 2 : i32
    %54 = tpu.dynamic_rotate %35 by %c2_i32 dim 1 : vector<1x256xf32>, i32 -> vector<1x256xf32>
    %55 = arith.mulf %54, %39 : vector<1x256xf32>
    %c1_i32 = arith.constant 1 : i32
    %56 = tpu.dynamic_rotate %35 by %c1_i32 dim 1 : vector<1x256xf32>, i32 -> vector<1x256xf32>
    %57 = arith.mulf %56, %40 : vector<1x256xf32>
    %58 = arith.mulf %35, %41 : vector<1x256xf32>
    %c255_i32 = arith.constant 255 : i32
    %59 = tpu.dynamic_rotate %35 by %c255_i32 dim 1 : vector<1x256xf32>, i32 -> vector<1x256xf32>
    %60 = arith.mulf %59, %42 : vector<1x256xf32>
    %c254_i32 = arith.constant 254 : i32
    %61 = tpu.dynamic_rotate %35 by %c254_i32 dim 1 : vector<1x256xf32>, i32 -> vector<1x256xf32>
    %62 = arith.mulf %61, %43 : vector<1x256xf32>
    %c253_i32 = arith.constant 253 : i32
    %63 = tpu.dynamic_rotate %35 by %c253_i32 dim 1 : vector<1x256xf32>, i32 -> vector<1x256xf32>
    %64 = arith.mulf %63, %44 : vector<1x256xf32>
    %c0_18 = arith.constant 0 : index
    %65 = memref.load %arg5[%c0_18] : memref<98xf32, #tpu.memory_space<smem>>
    %66 = vector.broadcast %65 : f32 to vector<1x256xf32>
    %67 = arith.mulf %53, %66 : vector<1x256xf32>
    %c1 = arith.constant 1 : index
    %68 = memref.load %arg5[%c1] : memref<98xf32, #tpu.memory_space<smem>>
    %69 = vector.broadcast %68 : f32 to vector<1x256xf32>
    %70 = arith.mulf %55, %69 : vector<1x256xf32>
    %71 = arith.addf %67, %70 : vector<1x256xf32>
    %c2 = arith.constant 2 : index
    %72 = memref.load %arg5[%c2] : memref<98xf32, #tpu.memory_space<smem>>
    %73 = vector.broadcast %72 : f32 to vector<1x256xf32>
    %74 = arith.mulf %57, %73 : vector<1x256xf32>
    %75 = arith.addf %71, %74 : vector<1x256xf32>
    %c3 = arith.constant 3 : index
    %76 = memref.load %arg5[%c3] : memref<98xf32, #tpu.memory_space<smem>>
    %77 = vector.broadcast %76 : f32 to vector<1x256xf32>
    %78 = arith.mulf %58, %77 : vector<1x256xf32>
    %79 = arith.addf %75, %78 : vector<1x256xf32>
    %c4 = arith.constant 4 : index
    %80 = memref.load %arg5[%c4] : memref<98xf32, #tpu.memory_space<smem>>
    %81 = vector.broadcast %80 : f32 to vector<1x256xf32>
    %82 = arith.mulf %60, %81 : vector<1x256xf32>
    %83 = arith.addf %79, %82 : vector<1x256xf32>
    %c5 = arith.constant 5 : index
    %84 = memref.load %arg5[%c5] : memref<98xf32, #tpu.memory_space<smem>>
    %85 = vector.broadcast %84 : f32 to vector<1x256xf32>
    %86 = arith.mulf %62, %85 : vector<1x256xf32>
    %87 = arith.addf %83, %86 : vector<1x256xf32>
    %c6 = arith.constant 6 : index
    %88 = memref.load %arg5[%c6] : memref<98xf32, #tpu.memory_space<smem>>
    %89 = vector.broadcast %88 : f32 to vector<1x256xf32>
    %90 = arith.mulf %64, %89 : vector<1x256xf32>
    %91 = arith.addf %87, %90 : vector<1x256xf32>
    %c48_i32 = arith.constant 48 : i32
    %92 = tpu.dynamic_rotate %91 by %c48_i32 dim 1 : vector<1x256xf32>, i32 -> vector<1x256xf32>
    %93 = arith.mulf %92, %45 : vector<1x256xf32>
    %c7 = arith.constant 7 : index
    %94 = memref.load %arg5[%c7] : memref<98xf32, #tpu.memory_space<smem>>
    %95 = vector.broadcast %94 : f32 to vector<1x256xf32>
    %96 = arith.mulf %53, %95 : vector<1x256xf32>
    %c8 = arith.constant 8 : index
    %97 = memref.load %arg5[%c8] : memref<98xf32, #tpu.memory_space<smem>>
    %98 = vector.broadcast %97 : f32 to vector<1x256xf32>
    %99 = arith.mulf %55, %98 : vector<1x256xf32>
    %100 = arith.addf %96, %99 : vector<1x256xf32>
    %c9 = arith.constant 9 : index
    %101 = memref.load %arg5[%c9] : memref<98xf32, #tpu.memory_space<smem>>
    %102 = vector.broadcast %101 : f32 to vector<1x256xf32>
    %103 = arith.mulf %57, %102 : vector<1x256xf32>
    %104 = arith.addf %100, %103 : vector<1x256xf32>
    %c10 = arith.constant 10 : index
    %105 = memref.load %arg5[%c10] : memref<98xf32, #tpu.memory_space<smem>>
    %106 = vector.broadcast %105 : f32 to vector<1x256xf32>
    %107 = arith.mulf %58, %106 : vector<1x256xf32>
    %108 = arith.addf %104, %107 : vector<1x256xf32>
    %c11 = arith.constant 11 : index
    %109 = memref.load %arg5[%c11] : memref<98xf32, #tpu.memory_space<smem>>
    %110 = vector.broadcast %109 : f32 to vector<1x256xf32>
    %111 = arith.mulf %60, %110 : vector<1x256xf32>
    %112 = arith.addf %108, %111 : vector<1x256xf32>
    %c12 = arith.constant 12 : index
    %113 = memref.load %arg5[%c12] : memref<98xf32, #tpu.memory_space<smem>>
    %114 = vector.broadcast %113 : f32 to vector<1x256xf32>
    %115 = arith.mulf %62, %114 : vector<1x256xf32>
    %116 = arith.addf %112, %115 : vector<1x256xf32>
    %c13 = arith.constant 13 : index
    %117 = memref.load %arg5[%c13] : memref<98xf32, #tpu.memory_space<smem>>
    %118 = vector.broadcast %117 : f32 to vector<1x256xf32>
    %119 = arith.mulf %64, %118 : vector<1x256xf32>
    %120 = arith.addf %116, %119 : vector<1x256xf32>
    %c32_i32 = arith.constant 32 : i32
    %121 = tpu.dynamic_rotate %120 by %c32_i32 dim 1 : vector<1x256xf32>, i32 -> vector<1x256xf32>
    %122 = arith.mulf %121, %46 : vector<1x256xf32>
    %123 = arith.addf %93, %122 : vector<1x256xf32>
    %c14 = arith.constant 14 : index
    %124 = memref.load %arg5[%c14] : memref<98xf32, #tpu.memory_space<smem>>
    %125 = vector.broadcast %124 : f32 to vector<1x256xf32>
    %126 = arith.mulf %53, %125 : vector<1x256xf32>
    %c15 = arith.constant 15 : index
    %127 = memref.load %arg5[%c15] : memref<98xf32, #tpu.memory_space<smem>>
    %128 = vector.broadcast %127 : f32 to vector<1x256xf32>
    %129 = arith.mulf %55, %128 : vector<1x256xf32>
    %130 = arith.addf %126, %129 : vector<1x256xf32>
    %c16 = arith.constant 16 : index
    %131 = memref.load %arg5[%c16] : memref<98xf32, #tpu.memory_space<smem>>
    %132 = vector.broadcast %131 : f32 to vector<1x256xf32>
    %133 = arith.mulf %57, %132 : vector<1x256xf32>
    %134 = arith.addf %130, %133 : vector<1x256xf32>
    %c17 = arith.constant 17 : index
    %135 = memref.load %arg5[%c17] : memref<98xf32, #tpu.memory_space<smem>>
    %136 = vector.broadcast %135 : f32 to vector<1x256xf32>
    %137 = arith.mulf %58, %136 : vector<1x256xf32>
    %138 = arith.addf %134, %137 : vector<1x256xf32>
    %c18 = arith.constant 18 : index
    %139 = memref.load %arg5[%c18] : memref<98xf32, #tpu.memory_space<smem>>
    %140 = vector.broadcast %139 : f32 to vector<1x256xf32>
    %141 = arith.mulf %60, %140 : vector<1x256xf32>
    %142 = arith.addf %138, %141 : vector<1x256xf32>
    %c19 = arith.constant 19 : index
    %143 = memref.load %arg5[%c19] : memref<98xf32, #tpu.memory_space<smem>>
    %144 = vector.broadcast %143 : f32 to vector<1x256xf32>
    %145 = arith.mulf %62, %144 : vector<1x256xf32>
    %146 = arith.addf %142, %145 : vector<1x256xf32>
    %c20 = arith.constant 20 : index
    %147 = memref.load %arg5[%c20] : memref<98xf32, #tpu.memory_space<smem>>
    %148 = vector.broadcast %147 : f32 to vector<1x256xf32>
    %149 = arith.mulf %64, %148 : vector<1x256xf32>
    %150 = arith.addf %146, %149 : vector<1x256xf32>
    %c16_i32 = arith.constant 16 : i32
    %151 = tpu.dynamic_rotate %150 by %c16_i32 dim 1 : vector<1x256xf32>, i32 -> vector<1x256xf32>
    %152 = arith.mulf %151, %47 : vector<1x256xf32>
    %153 = arith.addf %123, %152 : vector<1x256xf32>
    %c21 = arith.constant 21 : index
    %154 = memref.load %arg5[%c21] : memref<98xf32, #tpu.memory_space<smem>>
    %155 = vector.broadcast %154 : f32 to vector<1x256xf32>
    %156 = arith.mulf %53, %155 : vector<1x256xf32>
    %c22 = arith.constant 22 : index
    %157 = memref.load %arg5[%c22] : memref<98xf32, #tpu.memory_space<smem>>
    %158 = vector.broadcast %157 : f32 to vector<1x256xf32>
    %159 = arith.mulf %55, %158 : vector<1x256xf32>
    %160 = arith.addf %156, %159 : vector<1x256xf32>
    %c23 = arith.constant 23 : index
    %161 = memref.load %arg5[%c23] : memref<98xf32, #tpu.memory_space<smem>>
    %162 = vector.broadcast %161 : f32 to vector<1x256xf32>
    %163 = arith.mulf %57, %162 : vector<1x256xf32>
    %164 = arith.addf %160, %163 : vector<1x256xf32>
    %c24 = arith.constant 24 : index
    %165 = memref.load %arg5[%c24] : memref<98xf32, #tpu.memory_space<smem>>
    %166 = vector.broadcast %165 : f32 to vector<1x256xf32>
    %167 = arith.mulf %58, %166 : vector<1x256xf32>
    %168 = arith.addf %164, %167 : vector<1x256xf32>
    %c25 = arith.constant 25 : index
    %169 = memref.load %arg5[%c25] : memref<98xf32, #tpu.memory_space<smem>>
    %170 = vector.broadcast %169 : f32 to vector<1x256xf32>
    %171 = arith.mulf %60, %170 : vector<1x256xf32>
    %172 = arith.addf %168, %171 : vector<1x256xf32>
    %c26 = arith.constant 26 : index
    %173 = memref.load %arg5[%c26] : memref<98xf32, #tpu.memory_space<smem>>
    %174 = vector.broadcast %173 : f32 to vector<1x256xf32>
    %175 = arith.mulf %62, %174 : vector<1x256xf32>
    %176 = arith.addf %172, %175 : vector<1x256xf32>
    %c27 = arith.constant 27 : index
    %177 = memref.load %arg5[%c27] : memref<98xf32, #tpu.memory_space<smem>>
    %178 = vector.broadcast %177 : f32 to vector<1x256xf32>
    %179 = arith.mulf %64, %178 : vector<1x256xf32>
    %180 = arith.addf %176, %179 : vector<1x256xf32>
    %181 = arith.mulf %180, %48 : vector<1x256xf32>
    %182 = arith.addf %153, %181 : vector<1x256xf32>
    %c28 = arith.constant 28 : index
    %183 = memref.load %arg5[%c28] : memref<98xf32, #tpu.memory_space<smem>>
    %184 = vector.broadcast %183 : f32 to vector<1x256xf32>
    %185 = arith.mulf %53, %184 : vector<1x256xf32>
    %c29 = arith.constant 29 : index
    %186 = memref.load %arg5[%c29] : memref<98xf32, #tpu.memory_space<smem>>
    %187 = vector.broadcast %186 : f32 to vector<1x256xf32>
    %188 = arith.mulf %55, %187 : vector<1x256xf32>
    %189 = arith.addf %185, %188 : vector<1x256xf32>
    %c30 = arith.constant 30 : index
    %190 = memref.load %arg5[%c30] : memref<98xf32, #tpu.memory_space<smem>>
    %191 = vector.broadcast %190 : f32 to vector<1x256xf32>
    %192 = arith.mulf %57, %191 : vector<1x256xf32>
    %193 = arith.addf %189, %192 : vector<1x256xf32>
    %c31 = arith.constant 31 : index
    %194 = memref.load %arg5[%c31] : memref<98xf32, #tpu.memory_space<smem>>
    %195 = vector.broadcast %194 : f32 to vector<1x256xf32>
    %196 = arith.mulf %58, %195 : vector<1x256xf32>
    %197 = arith.addf %193, %196 : vector<1x256xf32>
    %c32 = arith.constant 32 : index
    %198 = memref.load %arg5[%c32] : memref<98xf32, #tpu.memory_space<smem>>
    %199 = vector.broadcast %198 : f32 to vector<1x256xf32>
    %200 = arith.mulf %60, %199 : vector<1x256xf32>
    %201 = arith.addf %197, %200 : vector<1x256xf32>
    %c33 = arith.constant 33 : index
    %202 = memref.load %arg5[%c33] : memref<98xf32, #tpu.memory_space<smem>>
    %203 = vector.broadcast %202 : f32 to vector<1x256xf32>
    %204 = arith.mulf %62, %203 : vector<1x256xf32>
    %205 = arith.addf %201, %204 : vector<1x256xf32>
    %c34 = arith.constant 34 : index
    %206 = memref.load %arg5[%c34] : memref<98xf32, #tpu.memory_space<smem>>
    %207 = vector.broadcast %206 : f32 to vector<1x256xf32>
    %208 = arith.mulf %64, %207 : vector<1x256xf32>
    %209 = arith.addf %205, %208 : vector<1x256xf32>
    %c240_i32 = arith.constant 240 : i32
    %210 = tpu.dynamic_rotate %209 by %c240_i32 dim 1 : vector<1x256xf32>, i32 -> vector<1x256xf32>
    %211 = arith.mulf %210, %49 : vector<1x256xf32>
    %212 = arith.addf %182, %211 : vector<1x256xf32>
    %c35 = arith.constant 35 : index
    %213 = memref.load %arg5[%c35] : memref<98xf32, #tpu.memory_space<smem>>
    %214 = vector.broadcast %213 : f32 to vector<1x256xf32>
    %215 = arith.mulf %53, %214 : vector<1x256xf32>
    %c36 = arith.constant 36 : index
    %216 = memref.load %arg5[%c36] : memref<98xf32, #tpu.memory_space<smem>>
    %217 = vector.broadcast %216 : f32 to vector<1x256xf32>
    %218 = arith.mulf %55, %217 : vector<1x256xf32>
    %219 = arith.addf %215, %218 : vector<1x256xf32>
    %c37 = arith.constant 37 : index
    %220 = memref.load %arg5[%c37] : memref<98xf32, #tpu.memory_space<smem>>
    %221 = vector.broadcast %220 : f32 to vector<1x256xf32>
    %222 = arith.mulf %57, %221 : vector<1x256xf32>
    %223 = arith.addf %219, %222 : vector<1x256xf32>
    %c38 = arith.constant 38 : index
    %224 = memref.load %arg5[%c38] : memref<98xf32, #tpu.memory_space<smem>>
    %225 = vector.broadcast %224 : f32 to vector<1x256xf32>
    %226 = arith.mulf %58, %225 : vector<1x256xf32>
    %227 = arith.addf %223, %226 : vector<1x256xf32>
    %c39 = arith.constant 39 : index
    %228 = memref.load %arg5[%c39] : memref<98xf32, #tpu.memory_space<smem>>
    %229 = vector.broadcast %228 : f32 to vector<1x256xf32>
    %230 = arith.mulf %60, %229 : vector<1x256xf32>
    %231 = arith.addf %227, %230 : vector<1x256xf32>
    %c40 = arith.constant 40 : index
    %232 = memref.load %arg5[%c40] : memref<98xf32, #tpu.memory_space<smem>>
    %233 = vector.broadcast %232 : f32 to vector<1x256xf32>
    %234 = arith.mulf %62, %233 : vector<1x256xf32>
    %235 = arith.addf %231, %234 : vector<1x256xf32>
    %c41 = arith.constant 41 : index
    %236 = memref.load %arg5[%c41] : memref<98xf32, #tpu.memory_space<smem>>
    %237 = vector.broadcast %236 : f32 to vector<1x256xf32>
    %238 = arith.mulf %64, %237 : vector<1x256xf32>
    %239 = arith.addf %235, %238 : vector<1x256xf32>
    %c224_i32 = arith.constant 224 : i32
    %240 = tpu.dynamic_rotate %239 by %c224_i32 dim 1 : vector<1x256xf32>, i32 -> vector<1x256xf32>
    %241 = arith.mulf %240, %50 : vector<1x256xf32>
    %242 = arith.addf %212, %241 : vector<1x256xf32>
    %c42 = arith.constant 42 : index
    %243 = memref.load %arg5[%c42] : memref<98xf32, #tpu.memory_space<smem>>
    %244 = vector.broadcast %243 : f32 to vector<1x256xf32>
    %245 = arith.mulf %53, %244 : vector<1x256xf32>
    %c43 = arith.constant 43 : index
    %246 = memref.load %arg5[%c43] : memref<98xf32, #tpu.memory_space<smem>>
    %247 = vector.broadcast %246 : f32 to vector<1x256xf32>
    %248 = arith.mulf %55, %247 : vector<1x256xf32>
    %249 = arith.addf %245, %248 : vector<1x256xf32>
    %c44 = arith.constant 44 : index
    %250 = memref.load %arg5[%c44] : memref<98xf32, #tpu.memory_space<smem>>
    %251 = vector.broadcast %250 : f32 to vector<1x256xf32>
    %252 = arith.mulf %57, %251 : vector<1x256xf32>
    %253 = arith.addf %249, %252 : vector<1x256xf32>
    %c45 = arith.constant 45 : index
    %254 = memref.load %arg5[%c45] : memref<98xf32, #tpu.memory_space<smem>>
    %255 = vector.broadcast %254 : f32 to vector<1x256xf32>
    %256 = arith.mulf %58, %255 : vector<1x256xf32>
    %257 = arith.addf %253, %256 : vector<1x256xf32>
    %c46 = arith.constant 46 : index
    %258 = memref.load %arg5[%c46] : memref<98xf32, #tpu.memory_space<smem>>
    %259 = vector.broadcast %258 : f32 to vector<1x256xf32>
    %260 = arith.mulf %60, %259 : vector<1x256xf32>
    %261 = arith.addf %257, %260 : vector<1x256xf32>
    %c47 = arith.constant 47 : index
    %262 = memref.load %arg5[%c47] : memref<98xf32, #tpu.memory_space<smem>>
    %263 = vector.broadcast %262 : f32 to vector<1x256xf32>
    %264 = arith.mulf %62, %263 : vector<1x256xf32>
    %265 = arith.addf %261, %264 : vector<1x256xf32>
    %c48 = arith.constant 48 : index
    %266 = memref.load %arg5[%c48] : memref<98xf32, #tpu.memory_space<smem>>
    %267 = vector.broadcast %266 : f32 to vector<1x256xf32>
    %268 = arith.mulf %64, %267 : vector<1x256xf32>
    %269 = arith.addf %265, %268 : vector<1x256xf32>
    %c208_i32 = arith.constant 208 : i32
    %270 = tpu.dynamic_rotate %269 by %c208_i32 dim 1 : vector<1x256xf32>, i32 -> vector<1x256xf32>
    %271 = arith.mulf %270, %51 : vector<1x256xf32>
    %272 = arith.addf %242, %271 : vector<1x256xf32>
    %c3_i32_19 = arith.constant 3 : i32
    %273 = tpu.dynamic_rotate %36 by %c3_i32_19 dim 1 : vector<1x256xf32>, i32 -> vector<1x256xf32>
    %274 = arith.mulf %273, %38 : vector<1x256xf32>
    %c2_i32_20 = arith.constant 2 : i32
    %275 = tpu.dynamic_rotate %36 by %c2_i32_20 dim 1 : vector<1x256xf32>, i32 -> vector<1x256xf32>
    %276 = arith.mulf %275, %39 : vector<1x256xf32>
    %c1_i32_21 = arith.constant 1 : i32
    %277 = tpu.dynamic_rotate %36 by %c1_i32_21 dim 1 : vector<1x256xf32>, i32 -> vector<1x256xf32>
    %278 = arith.mulf %277, %40 : vector<1x256xf32>
    %279 = arith.mulf %36, %41 : vector<1x256xf32>
    %c255_i32_22 = arith.constant 255 : i32
    %280 = tpu.dynamic_rotate %36 by %c255_i32_22 dim 1 : vector<1x256xf32>, i32 -> vector<1x256xf32>
    %281 = arith.mulf %280, %42 : vector<1x256xf32>
    %c254_i32_23 = arith.constant 254 : i32
    %282 = tpu.dynamic_rotate %36 by %c254_i32_23 dim 1 : vector<1x256xf32>, i32 -> vector<1x256xf32>
    %283 = arith.mulf %282, %43 : vector<1x256xf32>
    %c253_i32_24 = arith.constant 253 : i32
    %284 = tpu.dynamic_rotate %36 by %c253_i32_24 dim 1 : vector<1x256xf32>, i32 -> vector<1x256xf32>
    %285 = arith.mulf %284, %44 : vector<1x256xf32>
    %c49 = arith.constant 49 : index
    %286 = memref.load %arg5[%c49] : memref<98xf32, #tpu.memory_space<smem>>
    %287 = vector.broadcast %286 : f32 to vector<1x256xf32>
    %288 = arith.mulf %274, %287 : vector<1x256xf32>
    %c50 = arith.constant 50 : index
    %289 = memref.load %arg5[%c50] : memref<98xf32, #tpu.memory_space<smem>>
    %290 = vector.broadcast %289 : f32 to vector<1x256xf32>
    %291 = arith.mulf %276, %290 : vector<1x256xf32>
    %292 = arith.addf %288, %291 : vector<1x256xf32>
    %c51 = arith.constant 51 : index
    %293 = memref.load %arg5[%c51] : memref<98xf32, #tpu.memory_space<smem>>
    %294 = vector.broadcast %293 : f32 to vector<1x256xf32>
    %295 = arith.mulf %278, %294 : vector<1x256xf32>
    %296 = arith.addf %292, %295 : vector<1x256xf32>
    %c52 = arith.constant 52 : index
    %297 = memref.load %arg5[%c52] : memref<98xf32, #tpu.memory_space<smem>>
    %298 = vector.broadcast %297 : f32 to vector<1x256xf32>
    %299 = arith.mulf %279, %298 : vector<1x256xf32>
    %300 = arith.addf %296, %299 : vector<1x256xf32>
    %c53 = arith.constant 53 : index
    %301 = memref.load %arg5[%c53] : memref<98xf32, #tpu.memory_space<smem>>
    %302 = vector.broadcast %301 : f32 to vector<1x256xf32>
    %303 = arith.mulf %281, %302 : vector<1x256xf32>
    %304 = arith.addf %300, %303 : vector<1x256xf32>
    %c54 = arith.constant 54 : index
    %305 = memref.load %arg5[%c54] : memref<98xf32, #tpu.memory_space<smem>>
    %306 = vector.broadcast %305 : f32 to vector<1x256xf32>
    %307 = arith.mulf %283, %306 : vector<1x256xf32>
    %308 = arith.addf %304, %307 : vector<1x256xf32>
    %c55 = arith.constant 55 : index
    %309 = memref.load %arg5[%c55] : memref<98xf32, #tpu.memory_space<smem>>
    %310 = vector.broadcast %309 : f32 to vector<1x256xf32>
    %311 = arith.mulf %285, %310 : vector<1x256xf32>
    %312 = arith.addf %308, %311 : vector<1x256xf32>
    %c48_i32_25 = arith.constant 48 : i32
    %313 = tpu.dynamic_rotate %312 by %c48_i32_25 dim 1 : vector<1x256xf32>, i32 -> vector<1x256xf32>
    %314 = arith.mulf %313, %45 : vector<1x256xf32>
    %c56 = arith.constant 56 : index
    %315 = memref.load %arg5[%c56] : memref<98xf32, #tpu.memory_space<smem>>
    %316 = vector.broadcast %315 : f32 to vector<1x256xf32>
    %317 = arith.mulf %274, %316 : vector<1x256xf32>
    %c57 = arith.constant 57 : index
    %318 = memref.load %arg5[%c57] : memref<98xf32, #tpu.memory_space<smem>>
    %319 = vector.broadcast %318 : f32 to vector<1x256xf32>
    %320 = arith.mulf %276, %319 : vector<1x256xf32>
    %321 = arith.addf %317, %320 : vector<1x256xf32>
    %c58 = arith.constant 58 : index
    %322 = memref.load %arg5[%c58] : memref<98xf32, #tpu.memory_space<smem>>
    %323 = vector.broadcast %322 : f32 to vector<1x256xf32>
    %324 = arith.mulf %278, %323 : vector<1x256xf32>
    %325 = arith.addf %321, %324 : vector<1x256xf32>
    %c59 = arith.constant 59 : index
    %326 = memref.load %arg5[%c59] : memref<98xf32, #tpu.memory_space<smem>>
    %327 = vector.broadcast %326 : f32 to vector<1x256xf32>
    %328 = arith.mulf %279, %327 : vector<1x256xf32>
    %329 = arith.addf %325, %328 : vector<1x256xf32>
    %c60 = arith.constant 60 : index
    %330 = memref.load %arg5[%c60] : memref<98xf32, #tpu.memory_space<smem>>
    %331 = vector.broadcast %330 : f32 to vector<1x256xf32>
    %332 = arith.mulf %281, %331 : vector<1x256xf32>
    %333 = arith.addf %329, %332 : vector<1x256xf32>
    %c61 = arith.constant 61 : index
    %334 = memref.load %arg5[%c61] : memref<98xf32, #tpu.memory_space<smem>>
    %335 = vector.broadcast %334 : f32 to vector<1x256xf32>
    %336 = arith.mulf %283, %335 : vector<1x256xf32>
    %337 = arith.addf %333, %336 : vector<1x256xf32>
    %c62 = arith.constant 62 : index
    %338 = memref.load %arg5[%c62] : memref<98xf32, #tpu.memory_space<smem>>
    %339 = vector.broadcast %338 : f32 to vector<1x256xf32>
    %340 = arith.mulf %285, %339 : vector<1x256xf32>
    %341 = arith.addf %337, %340 : vector<1x256xf32>
    %c32_i32_26 = arith.constant 32 : i32
    %342 = tpu.dynamic_rotate %341 by %c32_i32_26 dim 1 : vector<1x256xf32>, i32 -> vector<1x256xf32>
    %343 = arith.mulf %342, %46 : vector<1x256xf32>
    %344 = arith.addf %314, %343 : vector<1x256xf32>
    %c63 = arith.constant 63 : index
    %345 = memref.load %arg5[%c63] : memref<98xf32, #tpu.memory_space<smem>>
    %346 = vector.broadcast %345 : f32 to vector<1x256xf32>
    %347 = arith.mulf %274, %346 : vector<1x256xf32>
    %c64 = arith.constant 64 : index
    %348 = memref.load %arg5[%c64] : memref<98xf32, #tpu.memory_space<smem>>
    %349 = vector.broadcast %348 : f32 to vector<1x256xf32>
    %350 = arith.mulf %276, %349 : vector<1x256xf32>
    %351 = arith.addf %347, %350 : vector<1x256xf32>
    %c65 = arith.constant 65 : index
    %352 = memref.load %arg5[%c65] : memref<98xf32, #tpu.memory_space<smem>>
    %353 = vector.broadcast %352 : f32 to vector<1x256xf32>
    %354 = arith.mulf %278, %353 : vector<1x256xf32>
    %355 = arith.addf %351, %354 : vector<1x256xf32>
    %c66 = arith.constant 66 : index
    %356 = memref.load %arg5[%c66] : memref<98xf32, #tpu.memory_space<smem>>
    %357 = vector.broadcast %356 : f32 to vector<1x256xf32>
    %358 = arith.mulf %279, %357 : vector<1x256xf32>
    %359 = arith.addf %355, %358 : vector<1x256xf32>
    %c67 = arith.constant 67 : index
    %360 = memref.load %arg5[%c67] : memref<98xf32, #tpu.memory_space<smem>>
    %361 = vector.broadcast %360 : f32 to vector<1x256xf32>
    %362 = arith.mulf %281, %361 : vector<1x256xf32>
    %363 = arith.addf %359, %362 : vector<1x256xf32>
    %c68 = arith.constant 68 : index
    %364 = memref.load %arg5[%c68] : memref<98xf32, #tpu.memory_space<smem>>
    %365 = vector.broadcast %364 : f32 to vector<1x256xf32>
    %366 = arith.mulf %283, %365 : vector<1x256xf32>
    %367 = arith.addf %363, %366 : vector<1x256xf32>
    %c69 = arith.constant 69 : index
    %368 = memref.load %arg5[%c69] : memref<98xf32, #tpu.memory_space<smem>>
    %369 = vector.broadcast %368 : f32 to vector<1x256xf32>
    %370 = arith.mulf %285, %369 : vector<1x256xf32>
    %371 = arith.addf %367, %370 : vector<1x256xf32>
    %c16_i32_27 = arith.constant 16 : i32
    %372 = tpu.dynamic_rotate %371 by %c16_i32_27 dim 1 : vector<1x256xf32>, i32 -> vector<1x256xf32>
    %373 = arith.mulf %372, %47 : vector<1x256xf32>
    %374 = arith.addf %344, %373 : vector<1x256xf32>
    %c70 = arith.constant 70 : index
    %375 = memref.load %arg5[%c70] : memref<98xf32, #tpu.memory_space<smem>>
    %376 = vector.broadcast %375 : f32 to vector<1x256xf32>
    %377 = arith.mulf %274, %376 : vector<1x256xf32>
    %c71 = arith.constant 71 : index
    %378 = memref.load %arg5[%c71] : memref<98xf32, #tpu.memory_space<smem>>
    %379 = vector.broadcast %378 : f32 to vector<1x256xf32>
    %380 = arith.mulf %276, %379 : vector<1x256xf32>
    %381 = arith.addf %377, %380 : vector<1x256xf32>
    %c72 = arith.constant 72 : index
    %382 = memref.load %arg5[%c72] : memref<98xf32, #tpu.memory_space<smem>>
    %383 = vector.broadcast %382 : f32 to vector<1x256xf32>
    %384 = arith.mulf %278, %383 : vector<1x256xf32>
    %385 = arith.addf %381, %384 : vector<1x256xf32>
    %c73 = arith.constant 73 : index
    %386 = memref.load %arg5[%c73] : memref<98xf32, #tpu.memory_space<smem>>
    %387 = vector.broadcast %386 : f32 to vector<1x256xf32>
    %388 = arith.mulf %279, %387 : vector<1x256xf32>
    %389 = arith.addf %385, %388 : vector<1x256xf32>
    %c74 = arith.constant 74 : index
    %390 = memref.load %arg5[%c74] : memref<98xf32, #tpu.memory_space<smem>>
    %391 = vector.broadcast %390 : f32 to vector<1x256xf32>
    %392 = arith.mulf %281, %391 : vector<1x256xf32>
    %393 = arith.addf %389, %392 : vector<1x256xf32>
    %c75 = arith.constant 75 : index
    %394 = memref.load %arg5[%c75] : memref<98xf32, #tpu.memory_space<smem>>
    %395 = vector.broadcast %394 : f32 to vector<1x256xf32>
    %396 = arith.mulf %283, %395 : vector<1x256xf32>
    %397 = arith.addf %393, %396 : vector<1x256xf32>
    %c76 = arith.constant 76 : index
    %398 = memref.load %arg5[%c76] : memref<98xf32, #tpu.memory_space<smem>>
    %399 = vector.broadcast %398 : f32 to vector<1x256xf32>
    %400 = arith.mulf %285, %399 : vector<1x256xf32>
    %401 = arith.addf %397, %400 : vector<1x256xf32>
    %402 = arith.mulf %401, %48 : vector<1x256xf32>
    %403 = arith.addf %374, %402 : vector<1x256xf32>
    %c77 = arith.constant 77 : index
    %404 = memref.load %arg5[%c77] : memref<98xf32, #tpu.memory_space<smem>>
    %405 = vector.broadcast %404 : f32 to vector<1x256xf32>
    %406 = arith.mulf %274, %405 : vector<1x256xf32>
    %c78 = arith.constant 78 : index
    %407 = memref.load %arg5[%c78] : memref<98xf32, #tpu.memory_space<smem>>
    %408 = vector.broadcast %407 : f32 to vector<1x256xf32>
    %409 = arith.mulf %276, %408 : vector<1x256xf32>
    %410 = arith.addf %406, %409 : vector<1x256xf32>
    %c79 = arith.constant 79 : index
    %411 = memref.load %arg5[%c79] : memref<98xf32, #tpu.memory_space<smem>>
    %412 = vector.broadcast %411 : f32 to vector<1x256xf32>
    %413 = arith.mulf %278, %412 : vector<1x256xf32>
    %414 = arith.addf %410, %413 : vector<1x256xf32>
    %c80 = arith.constant 80 : index
    %415 = memref.load %arg5[%c80] : memref<98xf32, #tpu.memory_space<smem>>
    %416 = vector.broadcast %415 : f32 to vector<1x256xf32>
    %417 = arith.mulf %279, %416 : vector<1x256xf32>
    %418 = arith.addf %414, %417 : vector<1x256xf32>
    %c81 = arith.constant 81 : index
    %419 = memref.load %arg5[%c81] : memref<98xf32, #tpu.memory_space<smem>>
    %420 = vector.broadcast %419 : f32 to vector<1x256xf32>
    %421 = arith.mulf %281, %420 : vector<1x256xf32>
    %422 = arith.addf %418, %421 : vector<1x256xf32>
    %c82 = arith.constant 82 : index
    %423 = memref.load %arg5[%c82] : memref<98xf32, #tpu.memory_space<smem>>
    %424 = vector.broadcast %423 : f32 to vector<1x256xf32>
    %425 = arith.mulf %283, %424 : vector<1x256xf32>
    %426 = arith.addf %422, %425 : vector<1x256xf32>
    %c83 = arith.constant 83 : index
    %427 = memref.load %arg5[%c83] : memref<98xf32, #tpu.memory_space<smem>>
    %428 = vector.broadcast %427 : f32 to vector<1x256xf32>
    %429 = arith.mulf %285, %428 : vector<1x256xf32>
    %430 = arith.addf %426, %429 : vector<1x256xf32>
    %c240_i32_28 = arith.constant 240 : i32
    %431 = tpu.dynamic_rotate %430 by %c240_i32_28 dim 1 : vector<1x256xf32>, i32 -> vector<1x256xf32>
    %432 = arith.mulf %431, %49 : vector<1x256xf32>
    %433 = arith.addf %403, %432 : vector<1x256xf32>
    %c84 = arith.constant 84 : index
    %434 = memref.load %arg5[%c84] : memref<98xf32, #tpu.memory_space<smem>>
    %435 = vector.broadcast %434 : f32 to vector<1x256xf32>
    %436 = arith.mulf %274, %435 : vector<1x256xf32>
    %c85 = arith.constant 85 : index
    %437 = memref.load %arg5[%c85] : memref<98xf32, #tpu.memory_space<smem>>
    %438 = vector.broadcast %437 : f32 to vector<1x256xf32>
    %439 = arith.mulf %276, %438 : vector<1x256xf32>
    %440 = arith.addf %436, %439 : vector<1x256xf32>
    %c86 = arith.constant 86 : index
    %441 = memref.load %arg5[%c86] : memref<98xf32, #tpu.memory_space<smem>>
    %442 = vector.broadcast %441 : f32 to vector<1x256xf32>
    %443 = arith.mulf %278, %442 : vector<1x256xf32>
    %444 = arith.addf %440, %443 : vector<1x256xf32>
    %c87 = arith.constant 87 : index
    %445 = memref.load %arg5[%c87] : memref<98xf32, #tpu.memory_space<smem>>
    %446 = vector.broadcast %445 : f32 to vector<1x256xf32>
    %447 = arith.mulf %279, %446 : vector<1x256xf32>
    %448 = arith.addf %444, %447 : vector<1x256xf32>
    %c88 = arith.constant 88 : index
    %449 = memref.load %arg5[%c88] : memref<98xf32, #tpu.memory_space<smem>>
    %450 = vector.broadcast %449 : f32 to vector<1x256xf32>
    %451 = arith.mulf %281, %450 : vector<1x256xf32>
    %452 = arith.addf %448, %451 : vector<1x256xf32>
    %c89 = arith.constant 89 : index
    %453 = memref.load %arg5[%c89] : memref<98xf32, #tpu.memory_space<smem>>
    %454 = vector.broadcast %453 : f32 to vector<1x256xf32>
    %455 = arith.mulf %283, %454 : vector<1x256xf32>
    %456 = arith.addf %452, %455 : vector<1x256xf32>
    %c90 = arith.constant 90 : index
    %457 = memref.load %arg5[%c90] : memref<98xf32, #tpu.memory_space<smem>>
    %458 = vector.broadcast %457 : f32 to vector<1x256xf32>
    %459 = arith.mulf %285, %458 : vector<1x256xf32>
    %460 = arith.addf %456, %459 : vector<1x256xf32>
    %c224_i32_29 = arith.constant 224 : i32
    %461 = tpu.dynamic_rotate %460 by %c224_i32_29 dim 1 : vector<1x256xf32>, i32 -> vector<1x256xf32>
    %462 = arith.mulf %461, %50 : vector<1x256xf32>
    %463 = arith.addf %433, %462 : vector<1x256xf32>
    %c91 = arith.constant 91 : index
    %464 = memref.load %arg5[%c91] : memref<98xf32, #tpu.memory_space<smem>>
    %465 = vector.broadcast %464 : f32 to vector<1x256xf32>
    %466 = arith.mulf %274, %465 : vector<1x256xf32>
    %c92 = arith.constant 92 : index
    %467 = memref.load %arg5[%c92] : memref<98xf32, #tpu.memory_space<smem>>
    %468 = vector.broadcast %467 : f32 to vector<1x256xf32>
    %469 = arith.mulf %276, %468 : vector<1x256xf32>
    %470 = arith.addf %466, %469 : vector<1x256xf32>
    %c93 = arith.constant 93 : index
    %471 = memref.load %arg5[%c93] : memref<98xf32, #tpu.memory_space<smem>>
    %472 = vector.broadcast %471 : f32 to vector<1x256xf32>
    %473 = arith.mulf %278, %472 : vector<1x256xf32>
    %474 = arith.addf %470, %473 : vector<1x256xf32>
    %c94 = arith.constant 94 : index
    %475 = memref.load %arg5[%c94] : memref<98xf32, #tpu.memory_space<smem>>
    %476 = vector.broadcast %475 : f32 to vector<1x256xf32>
    %477 = arith.mulf %279, %476 : vector<1x256xf32>
    %478 = arith.addf %474, %477 : vector<1x256xf32>
    %c95 = arith.constant 95 : index
    %479 = memref.load %arg5[%c95] : memref<98xf32, #tpu.memory_space<smem>>
    %480 = vector.broadcast %479 : f32 to vector<1x256xf32>
    %481 = arith.mulf %281, %480 : vector<1x256xf32>
    %482 = arith.addf %478, %481 : vector<1x256xf32>
    %c96 = arith.constant 96 : index
    %483 = memref.load %arg5[%c96] : memref<98xf32, #tpu.memory_space<smem>>
    %484 = vector.broadcast %483 : f32 to vector<1x256xf32>
    %485 = arith.mulf %283, %484 : vector<1x256xf32>
    %486 = arith.addf %482, %485 : vector<1x256xf32>
    %c97 = arith.constant 97 : index
    %487 = memref.load %arg5[%c97] : memref<98xf32, #tpu.memory_space<smem>>
    %488 = vector.broadcast %487 : f32 to vector<1x256xf32>
    %489 = arith.mulf %285, %488 : vector<1x256xf32>
    %490 = arith.addf %486, %489 : vector<1x256xf32>
    %c208_i32_30 = arith.constant 208 : i32
    %491 = tpu.dynamic_rotate %490 by %c208_i32_30 dim 1 : vector<1x256xf32>, i32 -> vector<1x256xf32>
    %492 = arith.mulf %491, %51 : vector<1x256xf32>
    %493 = arith.addf %463, %492 : vector<1x256xf32>
    %494 = arith.addf %272, %493 : vector<1x256xf32>
    %495 = arith.negf %494 : vector<1x256xf32>
    %496 = math.exp %495 : vector<1x256xf32>
    %cst_31 = arith.constant 1.000000e+00 : f32
    %497 = vector.broadcast %cst_31 : f32 to vector<1x256xf32>
    %498 = arith.addf %497, %496 : vector<1x256xf32>
    %499 = arith.divf %497, %498 : vector<1x256xf32>
    %500 = vector.shape_cast %499 : vector<1x256xf32> to vector<1x1x256xf32>
    %501 = vector.broadcast %500 : vector<1x1x256xf32> to vector<1x32x256xf32>
    %502 = arith.mulf %32, %501 : vector<1x32x256xf32>
    %c0_32 = arith.constant 0 : index
    %c0_33 = arith.constant 0 : index
    %c0_34 = arith.constant 0 : index
    %503 = vector.load %arg6[%c0_32, %c0_33, %c0_34] : memref<1x32x256xf32, #tpu.memory_space<vmem>>, vector<1x32x256xf32>
    tpu.vector_store %arg6[%c0_32, %c0_33, %c0_34], %502 {strides = array<i32>} : memref<1x32x256xf32, #tpu.memory_space<vmem>>, vector<1x32x256xf32>,
    return
  }
  func.func @transform_0(%arg0: i32) -> (i32, i32, i32) {
    %c0_i32 = arith.constant 0 : i32
    %c0_i32_0 = arith.constant 0 : i32
    %c0_i32_1 = arith.constant 0 : i32
    return %arg0, %c0_i32, %c0_i32_0 : i32, i32, i32
  }
  func.func @transform_1(%arg0: i32) -> (i32, i32) {
    %c0_i32 = arith.constant 0 : i32
    %c0_i32_0 = arith.constant 0 : i32
    %c0_i32_1 = arith.constant 0 : i32
    return %c0_i32, %c0_i32_0 : i32, i32
  }
  func.func @transform_2(%arg0: i32) -> (i32, i32) {
    %c0_i32 = arith.constant 0 : i32
    %c0_i32_0 = arith.constant 0 : i32
    %c0_i32_1 = arith.constant 0 : i32
    return %c0_i32, %c0_i32_0 : i32, i32
  }
  func.func @transform_3(%arg0: i32) -> (i32, i32) {
    %c0_i32 = arith.constant 0 : i32
    %c0_i32_0 = arith.constant 0 : i32
    %c0_i32_1 = arith.constant 0 : i32
    return %c0_i32, %c0_i32_0 : i32, i32
  }
  func.func @transform_4(%arg0: i32) -> i32 {
    %c0_i32 = arith.constant 0 : i32
    %c0_i32_0 = arith.constant 0 : i32
    return %c0_i32 : i32
  }
  func.func @transform_5(%arg0: i32) -> (i32, i32, i32) {
    %c0_i32 = arith.constant 0 : i32
    %c0_i32_0 = arith.constant 0 : i32
    %c0_i32_1 = arith.constant 0 : i32
    return %arg0, %c0_i32, %c0_i32_0 : i32, i32, i32
  }
}

</mosaic_0001>

<llo_original>
// kernel: tpu_custom_call.1
$region0: #{tpu_custom_call.1}
  #allocation0 [shape = 'u32[]', space=smem, size = 0x4, offset = 0x4, fixed_abs, tag = 'smem constant byte address 0x4 - core index']
  #allocation1 [shape = 'u32[72,128]{1,0:T(1,128)}', space=vmem, size = 0x9000, scoped, tag = 'internal scratch']
  %s0 = inlined_call_operand.hbm [shape: f32[2,32,256], index: 0, kind: input, shape index: {}]
  %s1 = inlined_call_operand.vmem [shape: f32[2,32], index: 1, kind: input, shape index: {}]
  %s2 = inlined_call_operand.vmem [shape: f32[32,2], index: 2, kind: input, shape index: {}]
  %s3 = inlined_call_operand.vmem [shape: f32[14,256], index: 3, kind: input, shape index: {}]
  %s4 = inlined_call_operand.vmem [shape: f32[98], index: 4, kind: input, shape index: {}]
  %s5 = inlined_call_operand.hbm [shape: f32[2,32,256], index: 5, kind: output, shape index: {}]
  %s6 = sld [smem:[#allocation0]]
  $region61: #{tpu_custom_call.1} parent=0
    _
  %s8 = ssub.s32 1, %s6
  %s9 = scalar_select 0, %s8, %s6
  $region1: #{tpu_custom_call.1} parent=0
    #allocation2 [shape = 'u8[65536]{0}', space=vmem, size = 0x10000, scoped, tag = 'input window, operand 0']
    #allocation3 [shape = 's32[2]{0}', space=sflag, size = 0x8, scoped, tag = 'scoped memory for tpu_custom_call.1']
    #allocation4 [shape = 's32[2]{0}', space=sflag, size = 0x8, scoped, tag = 'scoped memory for tpu_custom_call.1']
    #allocation5 [shape = 's32[2]{0}', space=sflag, size = 0x8, scoped, tag = 'scoped memory for tpu_custom_call.1']
    #allocation6 [shape = 'u8[512]{0}', space=smem, size = 0x200, scoped, tag = 'input window, operand 4, single buffered']
    #allocation7 [shape = 'u8[65536]{0}', space=vmem, size = 0x10000, scoped, tag = 'output window, operand 0']
    %10 = vsyncpa [#allocation3], 0
    %s11 = scalar_lea.sflag [#allocation3], 1
    %12 = vsyncpa %s11, 0
    %13 = vsyncpa [#allocation5], 0
    %14 = vsyncpa [#allocation4], 0
    %s15 = scalar_lea.sflag [#allocation4], 1
    %16 = vsyncpa %s15, 0
    loop: start=0, step=1, limit=4
    $region2: #{tpu_custom_call.1} parent=1 // loop_pre_header
      _
    $region3: #{tpu_custom_call.1} parent=1 // loop_header
      %s18 = sphi 0, %s22
      %p19 = scmp.ge.s32.totalorder %s18, 4
      %s28 = sphi 0, %s30
      %s31 = sphi 0, %s28
      %s32 = sphi 0, %s31
      %s48 = sphi 0, %s32
      %s52 = sphi 0, %s52
      %s54 = sphi 0, %s52
      %s55 = sphi 0, %s54
      %s69 = sphi 0, %s55
      %s73 = sphi 0, %s73
      %s75 = sphi 0, %s73
      %s76 = sphi 0, %s75
      %s90 = sphi 0, %s76
      %s94 = sphi 0, %s94
      %s96 = sphi 0, %s94
      %s97 = sphi 0, %s96
      %s111 = sphi 0, %s97
      %s115 = sphi 0, %s115
      %s117 = sphi 0, %s115
      %s118 = sphi 0, %s117
      %s132 = sphi 0, %s118
      %s138 = sphi 0, %s140
      %s141 = sphi 0, %s138
      %s142 = sphi 0, %s141
      %s158 = sphi 0, %s142
    $region4: #{tpu_custom_call.1} parent=1 // loop_header_branch
      %21 = sbr.rel (%p19) target = $region8
    $region5: #{tpu_custom_call.1} parent=1 // loop_body
      %s23 = ssub.s32 %s18, 1
      %s24 = ssub.s32 %s18, 2
      %s25 = sadd.s32 %s18, 1
      %s26 = ssub.s32 %s18, %s25
      %p27 = scmp.eq.s32.totalorder %s26, 0
      %s29 = sadd.s32 %s28, 1
      %s30 = scalar_select %p27, %s28, %s29
      %p33 = pneg %p27
      %p34 = scmp.eq.s32.totalorder %s18, 1
      %p35 = por %p33, %p34
      %p36 = scmp.ne.s32.totalorder %s28, %s31
      %p37 = scmp.eq.s32.totalorder %s18, 0
      %p38 = por %p36, %p37
      %p39 = scmp.ne.s32.totalorder %s28, %s31
      %p40 = scmp.eq.s32.totalorder %s23, 1
      %p41 = por %p39, %p40
      %p42 = scmp.ne.s32.totalorder %s31, %s32
      %p43 = scmp.eq.s32.totalorder %s23, 0
      %p44 = por %p42, %p43
      %p45 = scmp.ne.s32.totalorder %s31, %s32
      %p46 = scmp.eq.s32.totalorder %s24, 1
      %p47 = por %p45, %p46
      %p49 = scmp.ne.s32.totalorder %s32, %s48
      %p50 = scmp.eq.s32.totalorder %s24, 0
      %p51 = por %p49, %p50
      %s53 = sadd.s32 %s52, 1
      %p56 = scmp.eq.s32.totalorder %s18, 1
      %p57 = scmp.ne.s32.totalorder %s52, %s54
      %p58 = scmp.eq.s32.totalorder %s18, 0
      %p59 = por %p57, %p58
      %p60 = scmp.ne.s32.totalorder %s52, %s54
      %p61 = scmp.eq.s32.totalorder %s23, 1
      %p62 = por %p60, %p61
      %p63 = scmp.ne.s32.totalorder %s54, %s55
      %p64 = scmp.eq.s32.totalorder %s23, 0
      %p65 = por %p63, %p64
      %p66 = scmp.ne.s32.totalorder %s54, %s55
      %p67 = scmp.eq.s32.totalorder %s24, 1
      %p68 = por %p66, %p67
      %p70 = scmp.ne.s32.totalorder %s55, %s69
      %p71 = scmp.eq.s32.totalorder %s24, 0
      %p72 = por %p70, %p71
      %s74 = sadd.s32 %s73, 1
      %p77 = scmp.eq.s32.totalorder %s18, 1
      %p78 = scmp.ne.s32.totalorder %s73, %s75
      %p79 = scmp.eq.s32.totalorder %s18, 0
      %p80 = por %p78, %p79
      %p81 = scmp.ne.s32.totalorder %s73, %s75
      %p82 = scmp.eq.s32.totalorder %s23, 1
      %p83 = por %p81, %p82
      %p84 = scmp.ne.s32.totalorder %s75, %s76
      %p85 = scmp.eq.s32.totalorder %s23, 0
      %p86 = por %p84, %p85
      %p87 = scmp.ne.s32.totalorder %s75, %s76
      %p88 = scmp.eq.s32.totalorder %s24, 1
      %p89 = por %p87, %p88
      %p91 = scmp.ne.s32.totalorder %s76, %s90
      %p92 = scmp.eq.s32.totalorder %s24, 0
      %p93 = por %p91, %p92
      %s95 = sadd.s32 %s94, 1
      %p98 = scmp.eq.s32.totalorder %s18, 1
      %p99 = scmp.ne.s32.totalorder %s94, %s96
      %p100 = scmp.eq.s32.totalorder %s18, 0
      %p101 = por %p99, %p100
      %p102 = scmp.ne.s32.totalorder %s94, %s96
      %p103 = scmp.eq.s32.totalorder %s23, 1
      %p104 = por %p102, %p103
      %p105 = scmp.ne.s32.totalorder %s96, %s97
      %p106 = scmp.eq.s32.totalorder %s23, 0
      %p107 = por %p105, %p106
      %p108 = scmp.ne.s32.totalorder %s96, %s97
      %p109 = scmp.eq.s32.totalorder %s24, 1
      %p110 = por %p108, %p109
      %p112 = scmp.ne.s32.totalorder %s97, %s111
      %p113 = scmp.eq.s32.totalorder %s24, 0
      %p114 = por %p112, %p113
      %s116 = sadd.s32 %s115, 1
      %p119 = scmp.eq.s32.totalorder %s18, 1
      %p120 = scmp.ne.s32.totalorder %s115, %s117
      %p121 = scmp.eq.s32.totalorder %s18, 0
      %p122 = por %p120, %p121
      %p123 = scmp.ne.s32.totalorder %s115, %s117
      %p124 = scmp.eq.s32.totalorder %s23, 1
      %p125 = por %p123, %p124
      %p126 = scmp.ne.s32.totalorder %s117, %s118
      %p127 = scmp.eq.s32.totalorder %s23, 0
      %p128 = por %p126, %p127
      %p129 = scmp.ne.s32.totalorder %s117, %s118
      %p130 = scmp.eq.s32.totalorder %s24, 1
      %p131 = por %p129, %p130
      %p133 = scmp.ne.s32.totalorder %s118, %s132
      %p134 = scmp.eq.s32.totalorder %s24, 0
      %p135 = por %p133, %p134
      %s136 = ssub.s32 %s18, %s25
      %p137 = scmp.eq.s32.totalorder %s136, 0
      %s139 = sadd.s32 %s138, 1
      %s140 = scalar_select %p137, %s138, %s139
      %p143 = pneg %p137
      %p144 = scmp.eq.s32.totalorder %s18, 1
      %p145 = por %p143, %p144
      %p146 = scmp.ne.s32.totalorder %s138, %s141
      %p147 = scmp.eq.s32.totalorder %s18, 0
      %p148 = por %p146, %p147
      %p149 = scmp.ne.s32.totalorder %s138, %s141
      %p150 = scmp.eq.s32.totalorder %s23, 1
      %p151 = por %p149, %p150
      %p152 = scmp.ne.s32.totalorder %s141, %s142
      %p153 = scmp.eq.s32.totalorder %s23, 0
      %p154 = por %p152, %p153
      %p155 = scmp.ne.s32.totalorder %s141, %s142
      %p156 = scmp.eq.s32.totalorder %s24, 1
      %p157 = por %p155, %p156
      %p159 = scmp.ne.s32.totalorder %s142, %s158
      %p160 = scmp.eq.s32.totalorder %s24, 0
      %p161 = por %p159, %p160
      %p162 = scmp.le.s32.totalorder 1, %s18
      %p163 = scmp.lt.s32.totalorder %s18, 3
      %p164 = pnand %p162, %p163
      %p165 = pneg %p164
      // Predicated region
      $region9: #{tpu_custom_call.1} parent=5 // pred_check
        _
      $region10: #{tpu_custom_call.1} parent=5 // pred_check_branch
        %167 = sbr.rel (%p164) target = $region12
      $region11: #{tpu_custom_call.1} parent=5 // pred_region
        %s168 = ssub.s32 %s18, 1
        // Predicated region
        $region13: #{tpu_custom_call.1} parent=11 // pred_check
          %p169 = pneg %p65
        $region14: #{tpu_custom_call.1} parent=11 // pred_check_branch
          %171 = sbr.rel (%p169) target = $region16
        $region15: #{tpu_custom_call.1} parent=11 // pred_region
          _
        $region16: #{tpu_custom_call.1} parent=11 // pred_fallthru
          _
        // Predicated region
        $region17: #{tpu_custom_call.1} parent=11 // pred_check
          %p172 = pneg %p86
        $region18: #{tpu_custom_call.1} parent=11 // pred_check_branch
          %174 = sbr.rel (%p172) target = $region20
        $region19: #{tpu_custom_call.1} parent=11 // pred_region
          _
        $region20: #{tpu_custom_call.1} parent=11 // pred_fallthru
          _
        // Predicated region
        $region21: #{tpu_custom_call.1} parent=11 // pred_check
          %p175 = pneg %p107
        $region22: #{tpu_custom_call.1} parent=11 // pred_check_branch
          %177 = sbr.rel (%p175) target = $region24
        $region23: #{tpu_custom_call.1} parent=11 // pred_region
          _
        $region24: #{tpu_custom_call.1} parent=11 // pred_fallthru
          _
        // Predicated region
        $region25: #{tpu_custom_call.1} parent=11 // pred_check
          %p178 = pneg %p128
        $region26: #{tpu_custom_call.1} parent=11 // pred_check_branch
          %180 = sbr.rel (%p178) target = $region28
        $region27: #{tpu_custom_call.1} parent=11 // pred_region
          %182 = vsyncadd [#allocation5], 0
          %s184 = sshll.u32 %s4, 4
          %s185 = int_to_ptr.vmem [resolvable:$true] %s184
          %187 = dma.vmem_to_smem %s185, 16, [#allocation6], [#allocation5]
        $region28: #{tpu_custom_call.1} parent=11 // pred_fallthru
          _
      $region12: #{tpu_custom_call.1} parent=5 // pred_fallthru
        _
      %p188 = scmp.lt.s32.totalorder %s18, 2
      // Predicated region
      $region29: #{tpu_custom_call.1} parent=5 // pred_check
        %p189 = pneg %p188
      $region30: #{tpu_custom_call.1} parent=5 // pred_check_branch
        %191 = sbr.rel (%p189) target = $region32
      $region31: #{tpu_custom_call.1} parent=5 // pred_region
        // Predicated region
        $region33: #{tpu_custom_call.1} parent=31 // pred_check
          %p192 = pneg %p38
        $region34: #{tpu_custom_call.1} parent=31 // pred_check_branch
          %194 = sbr.rel (%p192) target = $region36
        $region35: #{tpu_custom_call.1} parent=31 // pred_region
          %s195 = sand.u32 %s28, 1
          %s196 = scalar_lea.sflag [#allocation3], %s195
          %s197 = sand.u32 %s28, 1
          %s198 = smul.addr %s197, 64
          %s199 = scalar_lea.vmem [#allocation2], %s198
          %201 = vsyncadd %s196, 0
          %s202 = smul.addr %s18, 8
          %s203 = smul.addr %s202, 8
          %s204 = scalar_lea.hbm %s0, %s203
          %s205 = sshll.u32 %s204, 4
          %s206 = int_to_ptr.hbm [resolvable:$true] %s205
          %s207 = sshll.u32 %s199, 4
          %s208 = int_to_ptr.vmem [resolvable:$true] %s207
          %213 = dma.hbm_to_vmem [thread:$0]  %s206, 1024, %s208, %s196, 256, 256, 16
        $region36: #{tpu_custom_call.1} parent=31 // pred_fallthru
          _
      $region32: #{tpu_custom_call.1} parent=5 // pred_fallthru
        _
      %p214 = scmp.le.s32.totalorder 1, %s18
      %p215 = scmp.lt.s32.totalorder %s18, 3
      %p216 = pnand %p214, %p215
      %p217 = pneg %p216
      // Predicated region
      $region37: #{tpu_custom_call.1} parent=5 // pred_check
        _
      $region38: #{tpu_custom_call.1} parent=5 // pred_check_branch
        %219 = sbr.rel (%p216) target = $region40
      $region39: #{tpu_custom_call.1} parent=5 // pred_region
        %s220 = ssub.s32 %s18, 1
        %s221 = sand.u32 %s31, 1
        %s222 = scalar_lea.sflag [#allocation3], %s221
        %s223 = sand.u32 %s31, 1
        %s224 = smul.addr %s223, 64
        %s225 = scalar_lea.vmem [#allocation2], %s224
        // Predicated region
        $region41: #{tpu_custom_call.1} parent=39 // pred_check
          %p226 = pneg %p44
        $region42: #{tpu_custom_call.1} parent=39 // pred_check_branch
          %228 = sbr.rel (%p226) target = $region44
        $region43: #{tpu_custom_call.1} parent=39 // pred_region
          %230 = dma.done %s222, 1024
        $region44: #{tpu_custom_call.1} parent=39 // pred_fallthru
          _
        // Predicated region
        $region45: #{tpu_custom_call.1} parent=39 // pred_check
          %p231 = pneg %p128
        $region46: #{tpu_custom_call.1} parent=39 // pred_check_branch
          %233 = sbr.rel (%p231) target = $region48
        $region47: #{tpu_custom_call.1} parent=39 // pred_region
          %235 = dma.done [#allocation5], 16
        $region48: #{tpu_custom_call.1} parent=39 // pred_fallthru
          _
        %236 = sfence
        %s237 = sand.u32 %s31, 1
        %s238 = scalar_lea.sflag [#allocation3], %s237
        %s239 = sand.u32 %s31, 1
        %s240 = smul.addr %s239, 64
        %s241 = scalar_lea.vmem [#allocation2], %s240
        %p242 = pneg %p44
        %p243 = pneg %p41
        %p244 = pneg %p65
        %p245 = pneg %p62
        %p246 = pneg %p86
        %p247 = pneg %p83
        %p248 = pneg %p107
        %p249 = pneg %p104
        %p250 = pneg %p128
        %p251 = pneg %p125
        %p252 = pneg %p154
        %p253 = pneg %p151
        %s254 = sand.u32 %s141, 1
        %s255 = scalar_lea.sflag [#allocation4], %s254
        %s256 = sand.u32 %s141, 1
        %s257 = smul.addr %s256, 64
        %s258 = scalar_lea.vmem [#allocation7], %s257
        %v259 = vld [vmem:[%s225] sm:$0xff]
        %v260 = vld [vmem:[%s225 + $0x8] sm:$0xff]
        %v261 = vld [vmem:[%s225 + $0x10] sm:$0xff]
        %v262 = vld [vmem:[%s225 + $0x18] sm:$0xff]
        %v263 = vld [vmem:[%s225 + $0x20] sm:$0xff]
        %v264 = vld [vmem:[%s225 + $0x28] sm:$0xff]
        %v265 = vld [vmem:[%s225 + $0x30] sm:$0xff]
        %v266 = vld [vmem:[%s225 + $0x38] sm:$0xff]
        %v267 = vadd.f32 %v259, %v260
        %268 = vadd.xlane.f32.xlu0 %v267
        %v269 = vpop.xlane.xlu0 %268
        %v270 = vadd.f32 %v261, %v262
        %271 = vadd.xlane.f32.xlu0 %v270
        %v272 = vpop.xlane.xlu0 %271
        %v273 = vadd.f32 %v263, %v264
        %274 = vadd.xlane.f32.xlu0 %v273
        %v275 = vpop.xlane.xlu0 %274
        %v276 = vadd.f32 %v265, %v266
        %277 = vadd.xlane.f32.xlu0 %v276
        %v278 = vpop.xlane.xlu0 %277
        %v279 = vrcp.pop 256.0
        %v280 = vmul.f32 256.0, %v279
        %v281 = vsub.f32 1.0, %v280
        %v282 = vmul.f32 %v279, %v281
        %v283 = vadd.f32 %v279, %v282
        %vm284 = vweird.f32 %v279
        %v285 = vsel %vm284, %v279, %v283
        %v286 = vmul.f32 %v269, %v285
        %v287 = vmul.f32 %v272, %v285
        %v288 = vmul.f32 %v275, %v285
        %v289 = vmul.f32 %v278, %v285
        %v290 = vmax.f32 %v259, %v260
        %291 = vmax.xlane.f32.xlu0 %v290
        %v292 = vpop.xlane.xlu0 %291
        %v293 = vmax.f32 %v261, %v262
        %294 = vmax.xlane.f32.xlu0 %v293
        %v295 = vpop.xlane.xlu0 %294
        %v296 = vmax.f32 %v263, %v264
        %297 = vmax.xlane.f32.xlu0 %v296
        %v298 = vpop.xlane.xlu0 %297
        %v299 = vmax.f32 %v265, %v266
        %300 = vmax.xlane.f32.xlu0 %v299
        %v301 = vpop.xlane.xlu0 %300
        %v302 = vld [vmem:[%s1] sm:$0x3]
        %v303 = vld [vmem:[%s2] sm:$0xff]
        %v304 = vld [vmem:[%s2 + $0x8] sm:$0xff]
        %v305 = vld [vmem:[%s2 + $0x10] sm:$0xff]
        %v306 = vld [vmem:[%s2 + $0x18] sm:$0xff]
        %v308 = vperm.slane %v302, 0
        %v309 = vlaneseq
        %v310 = vshrl.u32 %v309, 7
        %312 = vset.pattern.permute.xlu0 %v310
        %313 = vperm.xlu0 %312, %v308
        %v314 = vpop.permute.xlu0 %313
        %v315 = vlaneseq
        %v316 = vshrl.u32 %v315, 7
        %v317 = vadd.s32 %v316, 8
        %318 = vset.pattern.permute.xlu0 %v317
        %319 = vperm.xlu0 %318, %v308
        %v320 = vpop.permute.xlu0 %319
        %v321 = vlaneseq
        %v322 = vshrl.u32 %v321, 7
        %v323 = vadd.s32 %v322, 16
        %324 = vset.pattern.permute.xlu0 %v323
        %325 = vperm.xlu0 %324, %v308
        %v326 = vpop.permute.xlu0 %325
        %v327 = vlaneseq
        %v328 = vshrl.u32 %v327, 7
        %v329 = vadd.s32 %v328, 24
        %330 = vset.pattern.permute.xlu0 %v329
        %331 = vperm.xlu0 %330, %v308
        %v332 = vpop.permute.xlu0 %331
        %v333 = vperm.slane %v302, 1
        %v334 = vlaneseq
        %v335 = vshrl.u32 %v334, 7
        %337 = vset.pattern.permute.xlu0 %v335
        %338 = vperm.xlu0 %337, %v333
        %v339 = vpop.permute.xlu0 %338
        %v340 = vlaneseq
        %v341 = vshrl.u32 %v340, 7
        %v342 = vadd.s32 %v341, 8
        %343 = vset.pattern.permute.xlu0 %v342
        %344 = vperm.xlu0 %343, %v333
        %v345 = vpop.permute.xlu0 %344
        %v346 = vlaneseq
        %v347 = vshrl.u32 %v346, 7
        %v348 = vadd.s32 %v347, 16
        %349 = vset.pattern.permute.xlu0 %v348
        %350 = vperm.xlu0 %349, %v333
        %v351 = vpop.permute.xlu0 %350
        %v352 = vlaneseq
        %v353 = vshrl.u32 %v352, 7
        %v354 = vadd.s32 %v353, 24
        %355 = vset.pattern.permute.xlu0 %v354
        %356 = vperm.xlu0 %355, %v333
        %v357 = vpop.permute.xlu0 %356
        %v366 = vmul.f32 %v286, %v314
        %v367 = vmul.f32 %v287, %v320
        %v368 = vmul.f32 %v288, %v326
        %v369 = vmul.f32 %v289, %v332
        %v370 = vmul.f32 %v286, %v339
        %v371 = vmul.f32 %v287, %v345
        %v372 = vmul.f32 %v288, %v351
        %v373 = vmul.f32 %v289, %v357
        %382 = vset.pattern.permute.xlu0 0
        %383 = vperm.xlu0 %382, %v366
        %v384 = vpop.permute.xlu0 %383
        %385 = vset.pattern.permute.xlu0 0
        %386 = vperm.xlu0 %385, %v367
        %v387 = vpop.permute.xlu0 %386
        %388 = vset.pattern.permute.xlu0 0
        %389 = vperm.xlu0 %388, %v368
        %v390 = vpop.permute.xlu0 %389
        %391 = vset.pattern.permute.xlu0 0
        %392 = vperm.xlu0 %391, %v369
        %v393 = vpop.permute.xlu0 %392
        %394 = vset.pattern.permute.xlu0 0
        %395 = vperm.xlu0 %394, %v370
        %v396 = vpop.permute.xlu0 %395
        %397 = vset.pattern.permute.xlu0 0
        %398 = vperm.xlu0 %397, %v371
        %v399 = vpop.permute.xlu0 %398
        %400 = vset.pattern.permute.xlu0 0
        %401 = vperm.xlu0 %400, %v372
        %v402 = vpop.permute.xlu0 %401
        %403 = vset.pattern.permute.xlu0 0
        %404 = vperm.xlu0 %403, %v373
        %v405 = vpop.permute.xlu0 %404
        %v406 = vlaneseq
        %v407 = vand.u32 %v406, 127
        %v408 = vperm.slane %v384, %v407
        %v409 = vadd.s32 %v407, 4294967288
        %v410 = vperm.slane %v387, %v409
        %vm411 = vcmask 130112
        %v412 = vsel %vm411, %v410, %v408
        %v413 = vadd.s32 %v407, 4294967280
        %v414 = vperm.slane %v390, %v413
        %vm415 = vcmask 195712
        %v416 = vsel %vm415, %v414, %v412
        %v417 = vadd.s32 %v407, 4294967272
        %v418 = vperm.slane %v393, %v417
        %vm419 = vcmask 261312
        %v420 = vsel %vm419, %v418, %v416
        %v421 = vperm.slane %v396, %v407
        %v422 = vperm.slane %v399, %v409
        %v423 = vsel %vm411, %v422, %v421
        %v424 = vperm.slane %v402, %v413
        %v425 = vsel %vm415, %v424, %v423
        %v426 = vperm.slane %v405, %v417
        %v427 = vsel %vm419, %v426, %v425
        %vm428 = vcmask 1041409
        %v429 = vsel %vm428, %v427, %v420
        %vm431 = vcmask 254976
        %v432 = vsel %vm431, %v429, 0.0
        %433 = vadd.xlane.f32.xlu0 %v432
        %v434 = vpop.xlane.xlu0 %433
        %v435 = vmul.f32 %v292, %v314
        %v436 = vmul.f32 %v295, %v320
        %v437 = vmul.f32 %v298, %v326
        %v438 = vmul.f32 %v301, %v332
        %v439 = vmul.f32 %v292, %v339
        %v440 = vmul.f32 %v295, %v345
        %v441 = vmul.f32 %v298, %v351
        %v442 = vmul.f32 %v301, %v357
        %451 = vset.pattern.permute.xlu0 0
        %452 = vperm.xlu0 %451, %v435
        %v453 = vpop.permute.xlu0 %452
        %454 = vset.pattern.permute.xlu0 0
        %455 = vperm.xlu0 %454, %v436
        %v456 = vpop.permute.xlu0 %455
        %457 = vset.pattern.permute.xlu0 0
        %458 = vperm.xlu0 %457, %v437
        %v459 = vpop.permute.xlu0 %458
        %460 = vset.pattern.permute.xlu0 0
        %461 = vperm.xlu0 %460, %v438
        %v462 = vpop.permute.xlu0 %461
        %463 = vset.pattern.permute.xlu0 0
        %464 = vperm.xlu0 %463, %v439
        %v465 = vpop.permute.xlu0 %464
        %466 = vset.pattern.permute.xlu0 0
        %467 = vperm.xlu0 %466, %v440
        %v468 = vpop.permute.xlu0 %467
        %469 = vset.pattern.permute.xlu0 0
        %470 = vperm.xlu0 %469, %v441
        %v471 = vpop.permute.xlu0 %470
        %472 = vset.pattern.permute.xlu0 0
        %473 = vperm.xlu0 %472, %v442
        %v474 = vpop.permute.xlu0 %473
        %v475 = vperm.slane %v453, %v407
        %v476 = vperm.slane %v456, %v409
        %v477 = vsel %vm411, %v476, %v475
        %v478 = vperm.slane %v459, %v413
        %v479 = vsel %vm415, %v478, %v477
        %v480 = vperm.slane %v462, %v417
        %v481 = vsel %vm419, %v480, %v479
        %v482 = vperm.slane %v465, %v407
        %v483 = vperm.slane %v468, %v409
        %v484 = vsel %vm411, %v483, %v482
        %v485 = vperm.slane %v471, %v413
        %v486 = vsel %vm415, %v485, %v484
        %v487 = vperm.slane %v474, %v417
        %v488 = vsel %vm419, %v487, %v486
        %v489 = vsel %vm428, %v488, %v481
        %v491 = vsel %vm431, %v489, 0.0
        %492 = vadd.xlane.f32.xlu0 %v491
        %v493 = vpop.xlane.xlu0 %492
        %v494 = vadd.f32 %v434, %v493
        %v495 = vmax.f32 %v494, 0.0
        %v500 = vperm.slane %v303, 0
        %v501 = vlaneseq
        %v502 = vshrl.u32 %v501, 7
        %504 = vset.pattern.permute.xlu0 %v502
        %505 = vperm.xlu0 %504, %v500
        %v506 = vpop.permute.xlu0 %505
        %v507 = vperm.slane %v303, 1
        %v508 = vlaneseq
        %v509 = vshrl.u32 %v508, 7
        %511 = vset.pattern.permute.xlu0 %v509
        %512 = vperm.xlu0 %511, %v507
        %v513 = vpop.permute.xlu0 %512
        %v514 = vperm.slane %v303, 2
        %v515 = vlaneseq
        %v516 = vshrl.u32 %v515, 7
        %518 = vset.pattern.permute.xlu0 %v516
        %519 = vperm.xlu0 %518, %v514
        %v520 = vpop.permute.xlu0 %519
        %v521 = vperm.slane %v303, 3
        %v522 = vlaneseq
        %v523 = vshrl.u32 %v522, 7
        %525 = vset.pattern.permute.xlu0 %v523
        %526 = vperm.xlu0 %525, %v521
        %v527 = vpop.permute.xlu0 %526
        %v528 = vperm.slane %v303, 4
        %v529 = vlaneseq
        %v530 = vshrl.u32 %v529, 7
        %532 = vset.pattern.permute.xlu0 %v530
        %533 = vperm.xlu0 %532, %v528
        %v534 = vpop.permute.xlu0 %533
        %v535 = vperm.slane %v303, 5
        %v536 = vlaneseq
        %v537 = vshrl.u32 %v536, 7
        %539 = vset.pattern.permute.xlu0 %v537
        %540 = vperm.xlu0 %539, %v535
        %v541 = vpop.permute.xlu0 %540
        %v542 = vperm.slane %v303, 6
        %v543 = vlaneseq
        %v544 = vshrl.u32 %v543, 7
        %546 = vset.pattern.permute.xlu0 %v544
        %547 = vperm.xlu0 %546, %v542
        %v548 = vpop.permute.xlu0 %547
        %v549 = vperm.slane %v303, 7
        %v550 = vlaneseq
        %v551 = vshrl.u32 %v550, 7
        %553 = vset.pattern.permute.xlu0 %v551
        %554 = vperm.xlu0 %553, %v549
        %v555 = vpop.permute.xlu0 %554
        %v556 = vperm.slane %v304, 0
        %v557 = vlaneseq
        %v558 = vshrl.u32 %v557, 7
        %560 = vset.pattern.permute.xlu0 %v558
        %561 = vperm.xlu0 %560, %v556
        %v562 = vpop.permute.xlu0 %561
        %v563 = vperm.slane %v304, 1
        %v564 = vlaneseq
        %v565 = vshrl.u32 %v564, 7
        %567 = vset.pattern.permute.xlu0 %v565
        %568 = vperm.xlu0 %567, %v563
        %v569 = vpop.permute.xlu0 %568
        %v570 = vperm.slane %v304, 2
        %v571 = vlaneseq
        %v572 = vshrl.u32 %v571, 7
        %574 = vset.pattern.permute.xlu0 %v572
        %575 = vperm.xlu0 %574, %v570
        %v576 = vpop.permute.xlu0 %575
        %v577 = vperm.slane %v304, 3
        %v578 = vlaneseq
        %v579 = vshrl.u32 %v578, 7
        %581 = vset.pattern.permute.xlu0 %v579
        %582 = vperm.xlu0 %581, %v577
        %v583 = vpop.permute.xlu0 %582
        %v584 = vperm.slane %v304, 4
        %v585 = vlaneseq
        %v586 = vshrl.u32 %v585, 7
        %588 = vset.pattern.permute.xlu0 %v586
        %589 = vperm.xlu0 %588, %v584
        %v590 = vpop.permute.xlu0 %589
        %v591 = vperm.slane %v304, 5
        %v592 = vlaneseq
        %v593 = vshrl.u32 %v592, 7
        %595 = vset.pattern.permute.xlu0 %v593
        %596 = vperm.xlu0 %595, %v591
        %v597 = vpop.permute.xlu0 %596
        %v598 = vperm.slane %v304, 6
        %v599 = vlaneseq
        %v600 = vshrl.u32 %v599, 7
        %602 = vset.pattern.permute.xlu0 %v600
        %603 = vperm.xlu0 %602, %v598
        %v604 = vpop.permute.xlu0 %603
        %v605 = vperm.slane %v304, 7
        %v606 = vlaneseq
        %v607 = vshrl.u32 %v606, 7
        %609 = vset.pattern.permute.xlu0 %v607
        %610 = vperm.xlu0 %609, %v605
        %v611 = vpop.permute.xlu0 %610
        %v612 = vperm.slane %v305, 0
        %v613 = vlaneseq
        %v614 = vshrl.u32 %v613, 7
        %616 = vset.pattern.permute.xlu0 %v614
        %617 = vperm.xlu0 %616, %v612
        %v618 = vpop.permute.xlu0 %617
        %v619 = vperm.slane %v305, 1
        %v620 = vlaneseq
        %v621 = vshrl.u32 %v620, 7
        %623 = vset.pattern.permute.xlu0 %v621
        %624 = vperm.xlu0 %623, %v619
        %v625 = vpop.permute.xlu0 %624
        %v626 = vperm.slane %v305, 2
        %v627 = vlaneseq
        %v628 = vshrl.u32 %v627, 7
        %630 = vset.pattern.permute.xlu0 %v628
        %631 = vperm.xlu0 %630, %v626
        %v632 = vpop.permute.xlu0 %631
        %v633 = vperm.slane %v305, 3
        %v634 = vlaneseq
        %v635 = vshrl.u32 %v634, 7
        %637 = vset.pattern.permute.xlu0 %v635
        %638 = vperm.xlu0 %637, %v633
        %v639 = vpop.permute.xlu0 %638
        %v640 = vperm.slane %v305, 4
        %v641 = vlaneseq
        %v642 = vshrl.u32 %v641, 7
        %644 = vset.pattern.permute.xlu0 %v642
        %645 = vperm.xlu0 %644, %v640
        %v646 = vpop.permute.xlu0 %645
        %v647 = vperm.slane %v305, 5
        %v648 = vlaneseq
        %v649 = vshrl.u32 %v648, 7
        %651 = vset.pattern.permute.xlu0 %v649
        %652 = vperm.xlu0 %651, %v647
        %v653 = vpop.permute.xlu0 %652
        %v654 = vperm.slane %v305, 6
        %v655 = vlaneseq
        %v656 = vshrl.u32 %v655, 7
        %658 = vset.pattern.permute.xlu0 %v656
        %659 = vperm.xlu0 %658, %v654
        %v660 = vpop.permute.xlu0 %659
        %v661 = vperm.slane %v305, 7
        %v662 = vlaneseq
        %v663 = vshrl.u32 %v662, 7
        %665 = vset.pattern.permute.xlu0 %v663
        %666 = vperm.xlu0 %665, %v661
        %v667 = vpop.permute.xlu0 %666
        %v668 = vperm.slane %v306, 0
        %v669 = vlaneseq
        %v670 = vshrl.u32 %v669, 7
        %672 = vset.pattern.permute.xlu0 %v670
        %673 = vperm.xlu0 %672, %v668
        %v674 = vpop.permute.xlu0 %673
        %v675 = vperm.slane %v306, 1
        %v676 = vlaneseq
        %v677 = vshrl.u32 %v676, 7
        %679 = vset.pattern.permute.xlu0 %v677
        %680 = vperm.xlu0 %679, %v675
        %v681 = vpop.permute.xlu0 %680
        %v682 = vperm.slane %v306, 2
        %v683 = vlaneseq
        %v684 = vshrl.u32 %v683, 7
        %686 = vset.pattern.permute.xlu0 %v684
        %687 = vperm.xlu0 %686, %v682
        %v688 = vpop.permute.xlu0 %687
        %v689 = vperm.slane %v306, 3
        %v690 = vlaneseq
        %v691 = vshrl.u32 %v690, 7
        %693 = vset.pattern.permute.xlu0 %v691
        %694 = vperm.xlu0 %693, %v689
        %v695 = vpop.permute.xlu0 %694
        %v696 = vperm.slane %v306, 4
        %v697 = vlaneseq
        %v698 = vshrl.u32 %v697, 7
        %700 = vset.pattern.permute.xlu0 %v698
        %701 = vperm.xlu0 %700, %v696
        %v702 = vpop.permute.xlu0 %701
        %v703 = vperm.slane %v306, 5
        %v704 = vlaneseq
        %v705 = vshrl.u32 %v704, 7
        %707 = vset.pattern.permute.xlu0 %v705
        %708 = vperm.xlu0 %707, %v703
        %v709 = vpop.permute.xlu0 %708
        %v710 = vperm.slane %v306, 6
        %v711 = vlaneseq
        %v712 = vshrl.u32 %v711, 7
        %714 = vset.pattern.permute.xlu0 %v712
        %715 = vperm.xlu0 %714, %v710
        %v716 = vpop.permute.xlu0 %715
        %v717 = vperm.slane %v306, 7
        %v718 = vlaneseq
        %v719 = vshrl.u32 %v718, 7
        %721 = vset.pattern.permute.xlu0 %v719
        %722 = vperm.xlu0 %721, %v717
        %v723 = vpop.permute.xlu0 %722
        %v756 = vmul.f32 %v495, %v506
        %v757 = vmul.f32 %v495, %v513
        %v758 = vmul.f32 %v495, %v520
        %v759 = vmul.f32 %v495, %v527
        %v760 = vmul.f32 %v495, %v534
        %v761 = vmul.f32 %v495, %v541
        %v762 = vmul.f32 %v495, %v548
        %v763 = vmul.f32 %v495, %v555
        %v764 = vmul.f32 %v495, %v562
        %v765 = vmul.f32 %v495, %v569
        %v766 = vmul.f32 %v495, %v576
        %v767 = vmul.f32 %v495, %v583
        %v768 = vmul.f32 %v495, %v590
        %v769 = vmul.f32 %v495, %v597
        %v770 = vmul.f32 %v495, %v604
        %v771 = vmul.f32 %v495, %v611
        %v772 = vmul.f32 %v495, %v618
        %v773 = vmul.f32 %v495, %v625
        %v774 = vmul.f32 %v495, %v632
        %v775 = vmul.f32 %v495, %v639
        %v776 = vmul.f32 %v495, %v646
        %v777 = vmul.f32 %v495, %v653
        %v778 = vmul.f32 %v495, %v660
        %v779 = vmul.f32 %v495, %v667
        %v780 = vmul.f32 %v495, %v674
        %v781 = vmul.f32 %v495, %v681
        %v782 = vmul.f32 %v495, %v688
        %v783 = vmul.f32 %v495, %v695
        %v784 = vmul.f32 %v495, %v702
        %v785 = vmul.f32 %v495, %v709
        %v786 = vmul.f32 %v495, %v716
        %v787 = vmul.f32 %v495, %v723
        %820 = vset.pattern.permute.xlu0 0
        %821 = vperm.xlu0 %820, %v756
        %v822 = vpop.permute.xlu0 %821
        %823 = vset.pattern.permute.xlu0 0
        %824 = vperm.xlu0 %823, %v757
        %v825 = vpop.permute.xlu0 %824
        %826 = vset.pattern.permute.xlu0 0
        %827 = vperm.xlu0 %826, %v758
        %v828 = vpop.permute.xlu0 %827
        %829 = vset.pattern.permute.xlu0 0
        %830 = vperm.xlu0 %829, %v759
        %v831 = vpop.permute.xlu0 %830
        %832 = vset.pattern.permute.xlu0 0
        %833 = vperm.xlu0 %832, %v760
        %v834 = vpop.permute.xlu0 %833
        %835 = vset.pattern.permute.xlu0 0
        %836 = vperm.xlu0 %835, %v761
        %v837 = vpop.permute.xlu0 %836
        %838 = vset.pattern.permute.xlu0 0
        %839 = vperm.xlu0 %838, %v762
        %v840 = vpop.permute.xlu0 %839
        %841 = vset.pattern.permute.xlu0 0
        %842 = vperm.xlu0 %841, %v763
        %v843 = vpop.permute.xlu0 %842
        %844 = vset.pattern.permute.xlu0 0
        %845 = vperm.xlu0 %844, %v764
        %v846 = vpop.permute.xlu0 %845
        %847 = vset.pattern.permute.xlu0 0
        %848 = vperm.xlu0 %847, %v765
        %v849 = vpop.permute.xlu0 %848
        %850 = vset.pattern.permute.xlu0 0
        %851 = vperm.xlu0 %850, %v766
        %v852 = vpop.permute.xlu0 %851
        %853 = vset.pattern.permute.xlu0 0
        %854 = vperm.xlu0 %853, %v767
        %v855 = vpop.permute.xlu0 %854
        %856 = vset.pattern.permute.xlu0 0
        %857 = vperm.xlu0 %856, %v768
        %v858 = vpop.permute.xlu0 %857
        %859 = vset.pattern.permute.xlu0 0
        %860 = vperm.xlu0 %859, %v769
        %v861 = vpop.permute.xlu0 %860
        %862 = vset.pattern.permute.xlu0 0
        %863 = vperm.xlu0 %862, %v770
        %v864 = vpop.permute.xlu0 %863
        %865 = vset.pattern.permute.xlu0 0
        %866 = vperm.xlu0 %865, %v771
        %v867 = vpop.permute.xlu0 %866
        %868 = vset.pattern.permute.xlu0 0
        %869 = vperm.xlu0 %868, %v772
        %v870 = vpop.permute.xlu0 %869
        %871 = vset.pattern.permute.xlu0 0
        %872 = vperm.xlu0 %871, %v773
        %v873 = vpop.permute.xlu0 %872
        %874 = vset.pattern.permute.xlu0 0
        %875 = vperm.xlu0 %874, %v774
        %v876 = vpop.permute.xlu0 %875
        %877 = vset.pattern.permute.xlu0 0
        %878 = vperm.xlu0 %877, %v775
        %v879 = vpop.permute.xlu0 %878
        %880 = vset.pattern.permute.xlu0 0
        %881 = vperm.xlu0 %880, %v776
        %v882 = vpop.permute.xlu0 %881
        %883 = vset.pattern.permute.xlu0 0
        %884 = vperm.xlu0 %883, %v777
        %v885 = vpop.permute.xlu0 %884
        %886 = vset.pattern.permute.xlu0 0
        %887 = vperm.xlu0 %886, %v778
        %v888 = vpop.permute.xlu0 %887
        %889 = vset.pattern.permute.xlu0 0
        %890 = vperm.xlu0 %889, %v779
        %v891 = vpop.permute.xlu0 %890
        %892 = vset.pattern.permute.xlu0 0
        %893 = vperm.xlu0 %892, %v780
        %v894 = vpop.permute.xlu0 %893
        %895 = vset.pattern.permute.xlu0 0
        %896 = vperm.xlu0 %895, %v781
        %v897 = vpop.permute.xlu0 %896
        %898 = vset.pattern.permute.xlu0 0
        %899 = vperm.xlu0 %898, %v782
        %v900 = vpop.permute.xlu0 %899
        %901 = vset.pattern.permute.xlu0 0
        %902 = vperm.xlu0 %901, %v783
        %v903 = vpop.permute.xlu0 %902
        %904 = vset.pattern.permute.xlu0 0
        %905 = vperm.xlu0 %904, %v784
        %v906 = vpop.permute.xlu0 %905
        %907 = vset.pattern.permute.xlu0 0
        %908 = vperm.xlu0 %907, %v785
        %v909 = vpop.permute.xlu0 %908
        %910 = vset.pattern.permute.xlu0 0
        %911 = vperm.xlu0 %910, %v786
        %v912 = vpop.permute.xlu0 %911
        %913 = vset.pattern.permute.xlu0 0
        %914 = vperm.xlu0 %913, %v787
        %v915 = vpop.permute.xlu0 %914
        %v916 = vperm.slane %v822, %v407
        %v917 = vperm.slane %v825, %v407
        %v918 = vperm.slane %v828, %v407
        %v919 = vperm.slane %v831, %v407
        %v920 = vperm.slane %v834, %v407
        %v921 = vperm.slane %v837, %v407
        %v922 = vperm.slane %v840, %v407
        %v923 = vperm.slane %v843, %v407
        %v924 = vperm.slane %v846, %v407
        %v925 = vperm.slane %v849, %v407
        %v926 = vperm.slane %v852, %v407
        %v927 = vperm.slane %v855, %v407
        %v928 = vperm.slane %v858, %v407
        %v929 = vperm.slane %v861, %v407
        %v930 = vperm.slane %v864, %v407
        %v931 = vperm.slane %v867, %v407
        %v932 = vperm.slane %v870, %v407
        %v933 = vperm.slane %v873, %v407
        %v934 = vperm.slane %v876, %v407
        %v935 = vperm.slane %v879, %v407
        %v936 = vperm.slane %v882, %v407
        %v937 = vperm.slane %v885, %v407
        %v938 = vperm.slane %v888, %v407
        %v939 = vperm.slane %v891, %v407
        %v940 = vperm.slane %v894, %v407
        %v941 = vperm.slane %v897, %v407
        %v942 = vperm.slane %v900, %v407
        %v943 = vperm.slane %v903, %v407
        %v944 = vperm.slane %v906, %v407
        %v945 = vperm.slane %v909, %v407
        %v946 = vperm.slane %v912, %v407
        %v947 = vperm.slane %v915, %v407
        %v948 = vsel %vm428, %v917, %v916
        %vm949 = vcmask 1042434
        %v950 = vsel %vm949, %v918, %v948
        %vm951 = vcmask 1043459
        %v952 = vsel %vm951, %v919, %v950
        %vm953 = vcmask 1044484
        %v954 = vsel %vm953, %v920, %v952
        %vm955 = vcmask 1045509
        %v956 = vsel %vm955, %v921, %v954
        %vm957 = vcmask 1046534
        %v958 = vsel %vm957, %v922, %v956
        %vm959 = vcmask 1047559
        %v960 = vsel %vm959, %v923, %v958
        %v961 = vsel %vm428, %v925, %v924
        %v962 = vsel %vm949, %v926, %v961
        %v963 = vsel %vm951, %v927, %v962
        %v964 = vsel %vm953, %v928, %v963
        %v965 = vsel %vm955, %v929, %v964
        %v966 = vsel %vm957, %v930, %v965
        %v967 = vsel %vm959, %v931, %v966
        %v968 = vsel %vm428, %v933, %v932
        %v969 = vsel %vm949, %v934, %v968
        %v970 = vsel %vm951, %v935, %v969
        %v971 = vsel %vm953, %v936, %v970
        %v972 = vsel %vm955, %v937, %v971
        %v973 = vsel %vm957, %v938, %v972
        %v974 = vsel %vm959, %v939, %v973
        %v975 = vsel %vm428, %v941, %v940
        %v976 = vsel %vm949, %v942, %v975
        %v977 = vsel %vm951, %v943, %v976
        %v978 = vsel %vm953, %v944, %v977
        %v979 = vsel %vm955, %v945, %v978
        %v980 = vsel %vm957, %v946, %v979
        %v981 = vsel %vm959, %v947, %v980
        %vm986 = vcmask 15360
        %v987 = vsel %vm986, %v960, 0.0
        %988 = vadd.xlane.f32.xlu0 %v987
        %v989 = vpop.xlane.xlu0 %988
        %v990 = vsel %vm986, %v967, 0.0
        %991 = vadd.xlane.f32.xlu0 %v990
        %v992 = vpop.xlane.xlu0 %991
        %v993 = vsel %vm986, %v974, 0.0
        %994 = vadd.xlane.f32.xlu0 %v993
        %v995 = vpop.xlane.xlu0 %994
        %v996 = vsel %vm986, %v981, 0.0
        %997 = vadd.xlane.f32.xlu0 %v996
        %v998 = vpop.xlane.xlu0 %997
        %v999 = vxor.u32 %v989, 2147483648
        %v1000 = vxor.u32 %v992, 2147483648
        %v1001 = vxor.u32 %v995, 2147483648
        %v1002 = vxor.u32 %v998, 2147483648
        %v1003 = vmul.f32 %v999, 1.442695
        %v1004 = vpow.pop %v1003
        %v1005 = vmul.f32 %v1000, 1.442695
        %v1006 = vpow.pop %v1005
        %v1007 = vmul.f32 %v1001, 1.442695
        %v1008 = vpow.pop %v1007
        %v1009 = vmul.f32 %v1002, 1.442695
        %v1010 = vpow.pop %v1009
        %v1011 = vadd.f32 %v1004, 1.0
        %v1012 = vadd.f32 %v1006, 1.0
        %v1013 = vadd.f32 %v1008, 1.0
        %v1014 = vadd.f32 %v1010, 1.0
        %v1015 = vrcp.pop %v1011
        %v1016 = vmul.f32 %v1011, %v1015
        %v1017 = vsub.f32 1.0, %v1016
        %v1018 = vmul.f32 %v1015, %v1017
        %v1019 = vadd.f32 %v1015, %v1018
        %vm1020 = vweird.f32 %v1011
        %vm1021 = vweird.f32 %v1015
        %vm1022 = vmor %vm1020, %vm1021
        %v1023 = vsel %vm1022, %v1015, %v1019
        %v1024 = vand.u32 2147483647, %v1011
        %vm1025 = vcmp.eq.f32.partialorder %v1024, 8.507059e+37
        %v1026 = vand.u32 %v1011, 2147483648
        %v1027 = vor.u32 1.1754944e-38, %v1026
        %v1028 = vsel %vm1025, %v1027, %v1023
        %v1029 = vmul.f32 1.0, %v1028
        %v1030 = vrcp.pop %v1012
        %v1031 = vmul.f32 %v1012, %v1030
        %v1032 = vsub.f32 1.0, %v1031
        %v1033 = vmul.f32 %v1030, %v1032
        %v1034 = vadd.f32 %v1030, %v1033
        %vm1035 = vweird.f32 %v1012
        %vm1036 = vweird.f32 %v1030
        %vm1037 = vmor %vm1035, %vm1036
        %v1038 = vsel %vm1037, %v1030, %v1034
        %v1039 = vand.u32 2147483647, %v1012
        %vm1040 = vcmp.eq.f32.partialorder %v1039, 8.507059e+37
        %v1041 = vand.u32 %v1012, 2147483648
        %v1042 = vor.u32 1.1754944e-38, %v1041
        %v1043 = vsel %vm1040, %v1042, %v1038
        %v1044 = vmul.f32 1.0, %v1043
        %v1045 = vrcp.pop %v1013
        %v1046 = vmul.f32 %v1013, %v1045
        %v1047 = vsub.f32 1.0, %v1046
        %v1048 = vmul.f32 %v1045, %v1047
        %v1049 = vadd.f32 %v1045, %v1048
        %vm1050 = vweird.f32 %v1013
        %vm1051 = vweird.f32 %v1045
        %vm1052 = vmor %vm1050, %vm1051
        %v1053 = vsel %vm1052, %v1045, %v1049
        %v1054 = vand.u32 2147483647, %v1013
        %vm1055 = vcmp.eq.f32.partialorder %v1054, 8.507059e+37
        %v1056 = vand.u32 %v1013, 2147483648
        %v1057 = vor.u32 1.1754944e-38, %v1056
        %v1058 = vsel %vm1055, %v1057, %v1053
        %v1059 = vmul.f32 1.0, %v1058
        %v1060 = vrcp.pop %v1014
        %v1061 = vmul.f32 %v1014, %v1060
        %v1062 = vsub.f32 1.0, %v1061
        %v1063 = vmul.f32 %v1060, %v1062
        %v1064 = vadd.f32 %v1060, %v1063
        %vm1065 = vweird.f32 %v1014
        %vm1066 = vweird.f32 %v1060
        %vm1067 = vmor %vm1065, %vm1066
        %v1068 = vsel %vm1067, %v1060, %v1064
        %v1069 = vand.u32 2147483647, %v1014
        %vm1070 = vcmp.eq.f32.partialorder %v1069, 8.507059e+37
        %v1071 = vand.u32 %v1014, 2147483648
        %v1072 = vor.u32 1.1754944e-38, %v1071
        %v1073 = vsel %vm1070, %v1072, %v1068
        %v1074 = vmul.f32 1.0, %v1073
        %v1075 = vmul.f32 %v259, %v1029
        %v1076 = vmul.f32 %v260, %v1029
        %v1077 = vmul.f32 %v261, %v1044
        %v1078 = vmul.f32 %v262, %v1044
        %v1079 = vmul.f32 %v263, %v1059
        %v1080 = vmul.f32 %v264, %v1059
        %v1081 = vmul.f32 %v265, %v1074
        %v1082 = vmul.f32 %v266, %v1074
        %v1083 = vadd.f32 %v1075, %v1077
        %v1084 = vadd.f32 %v1083, %v1079
        %v1085 = vadd.f32 %v1084, %v1081
        %v1086 = vrot.slane %v1085, 4
        %v1087 = vadd.f32 %v1085, %v1086
        %v1088 = vrot.slane %v1087, 2
        %v1089 = vadd.f32 %v1087, %v1088
        %v1090 = vrot.slane %v1089, 1
        %v1091 = vadd.f32 %v1089, %v1090
        %v1092 = vadd.f32 %v1076, %v1078
        %v1093 = vadd.f32 %v1092, %v1080
        %v1094 = vadd.f32 %v1093, %v1082
        %v1095 = vrot.slane %v1094, 4
        %v1096 = vadd.f32 %v1094, %v1095
        %v1097 = vrot.slane %v1096, 2
        %v1098 = vadd.f32 %v1096, %v1097
        %v1099 = vrot.slane %v1098, 1
        %v1100 = vadd.f32 %v1098, %v1099
        %v1101 = vrcp.pop 32.0
        %v1102 = vmul.f32 32.0, %v1101
        %v1103 = vsub.f32 1.0, %v1102
        %v1104 = vmul.f32 %v1101, %v1103
        %v1105 = vadd.f32 %v1101, %v1104
        %vm1106 = vweird.f32 %v1101
        %v1107 = vsel %vm1106, %v1101, %v1105
        %v1108 = vmul.f32 %v1091, %v1107
        %v1109 = vmul.f32 %v1100, %v1107
        %v1110 = vmax.f32 %v1075, %v1079
        %v1111 = vmax.f32 %v1077, %v1081
        %v1112 = vmax.f32 %v1110, %v1111
        %v1113 = vrot.slane %v1112, 4
        %v1114 = vmax.f32 %v1112, %v1113
        %v1115 = vrot.slane %v1114, 2
        %v1116 = vmax.f32 %v1114, %v1115
        %v1117 = vrot.slane %v1116, 1
        %v1118 = vmax.f32 %v1116, %v1117
        %v1119 = vmax.f32 %v1076, %v1080
        %v1120 = vmax.f32 %v1078, %v1082
        %v1121 = vmax.f32 %v1119, %v1120
        %v1122 = vrot.slane %v1121, 4
        %v1123 = vmax.f32 %v1121, %v1122
        %v1124 = vrot.slane %v1123, 2
        %v1125 = vmax.f32 %v1123, %v1124
        %v1126 = vrot.slane %v1125, 1
        %v1127 = vmax.f32 %v1125, %v1126
        %v1128 = vld [vmem:[%s3] sm:$0xff]
        %v1129 = vld [vmem:[%s3 + $0x8] sm:$0xff]
        %v1130 = vld [vmem:[%s3 + $0x10] sm:$0x3f]
        %v1131 = vld [vmem:[%s3 + $0x18] sm:$0x3f]
        %1132 = vrot.lane.b32.xlu0 %v1108, 3
        %v1133 = vpop.permute.xlu0 %1132
        %1134 = vrot.lane.b32.xlu0 %v1109, 3
        %v1135 = vpop.permute.xlu0 %1134
        %vm1136 = vcmp.lt.s32.totalorder %v407, 3
        %v1137 = vsel %vm1136, %v1133, %v1135
        %v1138 = vsel %vm1136, %v1135, %v1133
        %v1139 = vmul.f32 %v1138, %v1128
        %v1140 = vmul.f32 %v1137, %v1129
        %1141 = vrot.lane.b32.xlu0 %v1108, 2
        %v1142 = vpop.permute.xlu0 %1141
        %1143 = vrot.lane.b32.xlu0 %v1109, 2
        %v1144 = vpop.permute.xlu0 %1143
        %vm1145 = vcmp.lt.s32.totalorder %v407, 2
        %v1146 = vsel %vm1145, %v1142, %v1144
        %v1147 = vsel %vm1145, %v1144, %v1142
        %v1150 = vrot.slane %v1128, 1
        %v1151 = vrot.slane %v1129, 1
        %v1154 = vmul.f32 %v1147, %v1150
        %v1155 = vmul.f32 %v1146, %v1151
        %1156 = vrot.lane.b32.xlu0 %v1108, 1
        %v1157 = vpop.permute.xlu0 %1156
        %1158 = vrot.lane.b32.xlu0 %v1109, 1
        %v1159 = vpop.permute.xlu0 %1158
        %vm1160 = vcmp.lt.s32.totalorder %v407, 1
        %v1161 = vsel %vm1160, %v1157, %v1159
        %v1162 = vsel %vm1160, %v1159, %v1157
        %v1163 = vrot.slane %v1128, 2
        %v1164 = vrot.slane %v1129, 2
        %v1167 = vmul.f32 %v1162, %v1163
        %v1168 = vmul.f32 %v1161, %v1164
        %v1169 = vmul.f32 %v1108, %v1128
        %v1170 = vmul.f32 %v1109, %v1129
        %1171 = vrot.lane.b32.xlu0 %v1108, 127
        %v1172 = vpop.permute.xlu0 %1171
        %1173 = vrot.lane.b32.xlu0 %v1109, 127
        %v1174 = vpop.permute.xlu0 %1173
        %vm1175 = vcmp.lt.s32.totalorder %v407, 127
        %v1176 = vsel %vm1175, %v1172, %v1174
        %v1177 = vsel %vm1175, %v1174, %v1172
        %v1178 = vrot.slane %v1128, 4
        %v1179 = vrot.slane %v1129, 4
        %v1182 = vmul.f32 %v1176, %v1178
        %v1183 = vmul.f32 %v1177, %v1179
        %1184 = vrot.lane.b32.xlu0 %v1108, 126
        %v1185 = vpop.permute.xlu0 %1184
        %1186 = vrot.lane.b32.xlu0 %v1109, 126
        %v1187 = vpop.permute.xlu0 %1186
        %vm1188 = vcmp.lt.s32.totalorder %v407, 126
        %v1189 = vsel %vm1188, %v1185, %v1187
        %v1190 = vsel %vm1188, %v1187, %v1185
        %v1191 = vrot.slane %v1128, 5
        %v1192 = vrot.slane %v1129, 5
        %v1195 = vmul.f32 %v1189, %v1191
        %v1196 = vmul.f32 %v1190, %v1192
        %1197 = vrot.lane.b32.xlu0 %v1108, 125
        %v1198 = vpop.permute.xlu0 %1197
        %1199 = vrot.lane.b32.xlu0 %v1109, 125
        %v1200 = vpop.permute.xlu0 %1199
        %vm1201 = vcmp.lt.s32.totalorder %v407, 125
        %v1202 = vsel %vm1201, %v1198, %v1200
        %v1203 = vsel %vm1201, %v1200, %v1198
        %v1204 = vrot.slane %v1128, 6
        %v1205 = vrot.slane %v1129, 6
        %v1208 = vmul.f32 %v1202, %v1204
        %v1209 = vmul.f32 %v1203, %v1205
        %s1210 = sld [smem:[#allocation6]]
        %v1211 = vstv %s1210
        %v1212 = vmul.f32 %v1139, %v1211
        %v1213 = vmul.f32 %v1140, %v1211
        %s1214 = sld [smem:[#allocation6 + $0x1]]
        %v1215 = vstv %s1214
        %v1216 = vmul.f32 %v1154, %v1215
        %v1217 = vmul.f32 %v1155, %v1215
        %v1218 = vadd.f32 %v1212, %v1216
        %v1219 = vadd.f32 %v1213, %v1217
        %s1220 = sld [smem:[#allocation6 + $0x2]]
        %v1221 = vstv %s1220
        %v1222 = vmul.f32 %v1167, %v1221
        %v1223 = vmul.f32 %v1168, %v1221
        %v1224 = vadd.f32 %v1218, %v1222
        %v1225 = vadd.f32 %v1219, %v1223
        %s1226 = sld [smem:[#allocation6 + $0x3]]
        %v1227 = vstv %s1226
        %v1228 = vmul.f32 %v1169, %v1227
        %v1229 = vmul.f32 %v1170, %v1227
        %v1232 = vrot.slane %v1228, 3
        %v1233 = vrot.slane %v1229, 3
        %v1236 = vadd.f32 %v1224, %v1232
        %v1237 = vadd.f32 %v1225, %v1233
        %s1238 = sld [smem:[#allocation6 + $0x4]]
        %v1239 = vstv %s1238
        %v1240 = vmul.f32 %v1182, %v1239
        %v1241 = vmul.f32 %v1183, %v1239
        %v1242 = vadd.f32 %v1236, %v1240
        %v1243 = vadd.f32 %v1237, %v1241
        %s1244 = sld [smem:[#allocation6 + $0x5]]
        %v1245 = vstv %s1244
        %v1246 = vmul.f32 %v1195, %v1245
        %v1247 = vmul.f32 %v1196, %v1245
        %v1248 = vadd.f32 %v1242, %v1246
        %v1249 = vadd.f32 %v1243, %v1247
        %s1250 = sld [smem:[#allocation6 + $0x6]]
        %v1251 = vstv %s1250
        %v1252 = vmul.f32 %v1208, %v1251
        %v1253 = vmul.f32 %v1209, %v1251
        %v1254 = vadd.f32 %v1248, %v1252
        %v1255 = vadd.f32 %v1249, %v1253
        %1256 = vrot.lane.b32.xlu0 %v1254, 48
        %v1257 = vpop.permute.xlu0 %1256
        %1258 = vrot.lane.b32.xlu0 %v1255, 48
        %v1259 = vpop.permute.xlu0 %1258
        %vm1260 = vcmp.lt.s32.totalorder %v407, 48
        %v1261 = vsel %vm1260, %v1257, %v1259
        %v1262 = vsel %vm1260, %v1259, %v1257
        %v1263 = vrot.slane %v1128, 7
        %v1264 = vrot.slane %v1129, 7
        %v1267 = vmul.f32 %v1262, %v1263
        %v1268 = vmul.f32 %v1261, %v1264
        %s1269 = sld [smem:[#allocation6 + $0x7]]
        %v1270 = vstv %s1269
        %v1271 = vmul.f32 %v1139, %v1270
        %v1272 = vmul.f32 %v1140, %v1270
        %s1273 = sld [smem:[#allocation6 + $0x8]]
        %v1274 = vstv %s1273
        %v1275 = vmul.f32 %v1154, %v1274
        %v1276 = vmul.f32 %v1155, %v1274
        %v1277 = vadd.f32 %v1271, %v1275
        %v1278 = vadd.f32 %v1272, %v1276
        %s1279 = sld [smem:[#allocation6 + $0x9]]
        %v1280 = vstv %s1279
        %v1281 = vmul.f32 %v1167, %v1280
        %v1282 = vmul.f32 %v1168, %v1280
        %v1283 = vadd.f32 %v1277, %v1281
        %v1284 = vadd.f32 %v1278, %v1282
        %s1285 = sld [smem:[#allocation6 + $0xa]]
        %v1286 = vstv %s1285
        %v1287 = vmul.f32 %v1169, %v1286
        %v1288 = vmul.f32 %v1170, %v1286
        %v1291 = vrot.slane %v1287, 3
        %v1292 = vrot.slane %v1288, 3
        %v1295 = vadd.f32 %v1283, %v1291
        %v1296 = vadd.f32 %v1284, %v1292
        %s1297 = sld [smem:[#allocation6 + $0xb]]
        %v1298 = vstv %s1297
        %v1299 = vmul.f32 %v1182, %v1298
        %v1300 = vmul.f32 %v1183, %v1298
        %v1301 = vadd.f32 %v1295, %v1299
        %v1302 = vadd.f32 %v1296, %v1300
        %s1303 = sld [smem:[#allocation6 + $0xc]]
        %v1304 = vstv %s1303
        %v1305 = vmul.f32 %v1195, %v1304
        %v1306 = vmul.f32 %v1196, %v1304
        %v1307 = vadd.f32 %v1301, %v1305
        %v1308 = vadd.f32 %v1302, %v1306
        %s1309 = sld [smem:[#allocation6 + $0xd]]
        %v1310 = vstv %s1309
        %v1311 = vmul.f32 %v1208, %v1310
        %v1312 = vmul.f32 %v1209, %v1310
        %v1313 = vadd.f32 %v1307, %v1311
        %v1314 = vadd.f32 %v1308, %v1312
        %1315 = vrot.lane.b32.xlu0 %v1313, 32
        %v1316 = vpop.permute.xlu0 %1315
        %1317 = vrot.lane.b32.xlu0 %v1314, 32
        %v1318 = vpop.permute.xlu0 %1317
        %vm1319 = vcmp.lt.s32.totalorder %v407, 32
        %v1320 = vsel %vm1319, %v1316, %v1318
        %v1321 = vsel %vm1319, %v1318, %v1316
        %v1322 = vmul.f32 %v1321, %v1130
        %v1323 = vmul.f32 %v1320, %v1131
        %v1324 = vadd.f32 %v1267, %v1322
        %v1325 = vadd.f32 %v1268, %v1323
        %s1326 = sld [smem:[#allocation6 + $0xe]]
        %v1327 = vstv %s1326
        %v1328 = vmul.f32 %v1139, %v1327
        %v1329 = vmul.f32 %v1140, %v1327
        %s1330 = sld [smem:[#allocation6 + $0xf]]
        %v1331 = vstv %s1330
        %v1332 = vmul.f32 %v1154, %v1331
        %v1333 = vmul.f32 %v1155, %v1331
        %v1334 = vadd.f32 %v1328, %v1332
        %v1335 = vadd.f32 %v1329, %v1333
        %s1336 = sld [smem:[#allocation6 + $0x10]]
        %v1337 = vstv %s1336
        %v1338 = vmul.f32 %v1167, %v1337
        %v1339 = vmul.f32 %v1168, %v1337
        %v1340 = vadd.f32 %v1334, %v1338
        %v1341 = vadd.f32 %v1335, %v1339
        %s1342 = sld [smem:[#allocation6 + $0x11]]
        %v1343 = vstv %s1342
        %v1344 = vmul.f32 %v1169, %v1343
        %v1345 = vmul.f32 %v1170, %v1343
        %v1348 = vrot.slane %v1344, 3
        %v1349 = vrot.slane %v1345, 3
        %v1352 = vadd.f32 %v1340, %v1348
        %v1353 = vadd.f32 %v1341, %v1349
        %s1354 = sld [smem:[#allocation6 + $0x12]]
        %v1355 = vstv %s1354
        %v1356 = vmul.f32 %v1182, %v1355
        %v1357 = vmul.f32 %v1183, %v1355
        %v1358 = vadd.f32 %v1352, %v1356
        %v1359 = vadd.f32 %v1353, %v1357
        %s1360 = sld [smem:[#allocation6 + $0x13]]
        %v1361 = vstv %s1360
        %v1362 = vmul.f32 %v1195, %v1361
        %v1363 = vmul.f32 %v1196, %v1361
        %v1364 = vadd.f32 %v1358, %v1362
        %v1365 = vadd.f32 %v1359, %v1363
        %s1366 = sld [smem:[#allocation6 + $0x14]]
        %v1367 = vstv %s1366
        %v1368 = vmul.f32 %v1208, %v1367
        %v1369 = vmul.f32 %v1209, %v1367
        %v1370 = vadd.f32 %v1364, %v1368
        %v1371 = vadd.f32 %v1365, %v1369
        %1372 = vrot.lane.b32.xlu0 %v1370, 16
        %v1373 = vpop.permute.xlu0 %1372
        %1374 = vrot.lane.b32.xlu0 %v1371, 16
        %v1375 = vpop.permute.xlu0 %1374
        %vm1376 = vcmp.lt.s32.totalorder %v407, 16
        %v1377 = vsel %vm1376, %v1373, %v1375
        %v1378 = vsel %vm1376, %v1375, %v1373
        %v1381 = vrot.slane %v1130, 1
        %v1382 = vrot.slane %v1131, 1
        %v1385 = vmul.f32 %v1378, %v1381
        %v1386 = vmul.f32 %v1377, %v1382
        %v1387 = vadd.f32 %v1324, %v1385
        %v1388 = vadd.f32 %v1325, %v1386
        %s1389 = sld [smem:[#allocation6 + $0x15]]
        %v1390 = vstv %s1389
        %v1391 = vmul.f32 %v1139, %v1390
        %v1392 = vmul.f32 %v1140, %v1390
        %s1393 = sld [smem:[#allocation6 + $0x16]]
        %v1394 = vstv %s1393
        %v1395 = vmul.f32 %v1154, %v1394
        %v1396 = vmul.f32 %v1155, %v1394
        %v1397 = vadd.f32 %v1391, %v1395
        %v1398 = vadd.f32 %v1392, %v1396
        %s1399 = sld [smem:[#allocation6 + $0x17]]
        %v1400 = vstv %s1399
        %v1401 = vmul.f32 %v1167, %v1400
        %v1402 = vmul.f32 %v1168, %v1400
        %v1403 = vadd.f32 %v1397, %v1401
        %v1404 = vadd.f32 %v1398, %v1402
        %s1405 = sld [smem:[#allocation6 + $0x18]]
        %v1406 = vstv %s1405
        %v1407 = vmul.f32 %v1169, %v1406
        %v1408 = vmul.f32 %v1170, %v1406
        %v1411 = vrot.slane %v1407, 3
        %v1412 = vrot.slane %v1408, 3
        %v1415 = vadd.f32 %v1403, %v1411
        %v1416 = vadd.f32 %v1404, %v1412
        %s1417 = sld [smem:[#allocation6 + $0x19]]
        %v1418 = vstv %s1417
        %v1419 = vmul.f32 %v1182, %v1418
        %v1420 = vmul.f32 %v1183, %v1418
        %v1421 = vadd.f32 %v1415, %v1419
        %v1422 = vadd.f32 %v1416, %v1420
        %s1423 = sld [smem:[#allocation6 + $0x1a]]
        %v1424 = vstv %s1423
        %v1425 = vmul.f32 %v1195, %v1424
        %v1426 = vmul.f32 %v1196, %v1424
        %v1427 = vadd.f32 %v1421, %v1425
        %v1428 = vadd.f32 %v1422, %v1426
        %s1429 = sld [smem:[#allocation6 + $0x1b]]
        %v1430 = vstv %s1429
        %v1431 = vmul.f32 %v1208, %v1430
        %v1432 = vmul.f32 %v1209, %v1430
        %v1433 = vadd.f32 %v1427, %v1431
        %v1434 = vadd.f32 %v1428, %v1432
        %v1435 = vrot.slane %v1130, 2
        %v1436 = vrot.slane %v1131, 2
        %v1439 = vmul.f32 %v1433, %v1435
        %v1440 = vmul.f32 %v1434, %v1436
        %v1441 = vadd.f32 %v1387, %v1439
        %v1442 = vadd.f32 %v1388, %v1440
        %s1443 = sld [smem:[#allocation6 + $0x1c]]
        %v1444 = vstv %s1443
        %v1445 = vmul.f32 %v1139, %v1444
        %v1446 = vmul.f32 %v1140, %v1444
        %s1447 = sld [smem:[#allocation6 + $0x1d]]
        %v1448 = vstv %s1447
        %v1449 = vmul.f32 %v1154, %v1448
        %v1450 = vmul.f32 %v1155, %v1448
        %v1451 = vadd.f32 %v1445, %v1449
        %v1452 = vadd.f32 %v1446, %v1450
        %s1453 = sld [smem:[#allocation6 + $0x1e]]
        %v1454 = vstv %s1453
        %v1455 = vmul.f32 %v1167, %v1454
        %v1456 = vmul.f32 %v1168, %v1454
        %v1457 = vadd.f32 %v1451, %v1455
        %v1458 = vadd.f32 %v1452, %v1456
        %s1459 = sld [smem:[#allocation6 + $0x1f]]
        %v1460 = vstv %s1459
        %v1461 = vmul.f32 %v1169, %v1460
        %v1462 = vmul.f32 %v1170, %v1460
        %v1465 = vrot.slane %v1461, 3
        %v1466 = vrot.slane %v1462, 3
        %v1469 = vadd.f32 %v1457, %v1465
        %v1470 = vadd.f32 %v1458, %v1466
        %s1471 = sld [smem:[#allocation6 + $0x20]]
        %v1472 = vstv %s1471
        %v1473 = vmul.f32 %v1182, %v1472
        %v1474 = vmul.f32 %v1183, %v1472
        %v1475 = vadd.f32 %v1469, %v1473
        %v1476 = vadd.f32 %v1470, %v1474
        %s1477 = sld [smem:[#allocation6 + $0x21]]
        %v1478 = vstv %s1477
        %v1479 = vmul.f32 %v1195, %v1478
        %v1480 = vmul.f32 %v1196, %v1478
        %v1481 = vadd.f32 %v1475, %v1479
        %v1482 = vadd.f32 %v1476, %v1480
        %s1483 = sld [smem:[#allocation6 + $0x22]]
        %v1484 = vstv %s1483
        %v1485 = vmul.f32 %v1208, %v1484
        %v1486 = vmul.f32 %v1209, %v1484
        %v1487 = vadd.f32 %v1481, %v1485
        %v1488 = vadd.f32 %v1482, %v1486
        %1489 = vrot.lane.b32.xlu0 %v1487, 112
        %v1490 = vpop.permute.xlu0 %1489
        %1491 = vrot.lane.b32.xlu0 %v1488, 112
        %v1492 = vpop.permute.xlu0 %1491
        %vm1493 = vcmp.lt.s32.totalorder %v407, 112
        %v1494 = vsel %vm1493, %v1490, %v1492
        %v1495 = vsel %vm1493, %v1492, %v1490
        %v1496 = vrot.slane %v1130, 3
        %v1497 = vrot.slane %v1131, 3
        %v1500 = vmul.f32 %v1494, %v1496
        %v1501 = vmul.f32 %v1495, %v1497
        %v1502 = vadd.f32 %v1441, %v1500
        %v1503 = vadd.f32 %v1442, %v1501
        %s1504 = sld [smem:[#allocation6 + $0x23]]
        %v1505 = vstv %s1504
        %v1506 = vmul.f32 %v1139, %v1505
        %v1507 = vmul.f32 %v1140, %v1505
        %s1508 = sld [smem:[#allocation6 + $0x24]]
        %v1509 = vstv %s1508
        %v1510 = vmul.f32 %v1154, %v1509
        %v1511 = vmul.f32 %v1155, %v1509
        %v1512 = vadd.f32 %v1506, %v1510
        %v1513 = vadd.f32 %v1507, %v1511
        %s1514 = sld [smem:[#allocation6 + $0x25]]
        %v1515 = vstv %s1514
        %v1516 = vmul.f32 %v1167, %v1515
        %v1517 = vmul.f32 %v1168, %v1515
        %v1518 = vadd.f32 %v1512, %v1516
        %v1519 = vadd.f32 %v1513, %v1517
        %s1520 = sld [smem:[#allocation6 + $0x26]]
        %v1521 = vstv %s1520
        %v1522 = vmul.f32 %v1169, %v1521
        %v1523 = vmul.f32 %v1170, %v1521
        %v1526 = vrot.slane %v1522, 3
        %v1527 = vrot.slane %v1523, 3
        %v1530 = vadd.f32 %v1518, %v1526
        %v1531 = vadd.f32 %v1519, %v1527
        %s1532 = sld [smem:[#allocation6 + $0x27]]
        %v1533 = vstv %s1532
        %v1534 = vmul.f32 %v1182, %v1533
        %v1535 = vmul.f32 %v1183, %v1533
        %v1536 = vadd.f32 %v1530, %v1534
        %v1537 = vadd.f32 %v1531, %v1535
        %s1538 = sld [smem:[#allocation6 + $0x28]]
        %v1539 = vstv %s1538
        %v1540 = vmul.f32 %v1195, %v1539
        %v1541 = vmul.f32 %v1196, %v1539
        %v1542 = vadd.f32 %v1536, %v1540
        %v1543 = vadd.f32 %v1537, %v1541
        %s1544 = sld [smem:[#allocation6 + $0x29]]
        %v1545 = vstv %s1544
        %v1546 = vmul.f32 %v1208, %v1545
        %v1547 = vmul.f32 %v1209, %v1545
        %v1548 = vadd.f32 %v1542, %v1546
        %v1549 = vadd.f32 %v1543, %v1547
        %1550 = vrot.lane.b32.xlu0 %v1548, 96
        %v1551 = vpop.permute.xlu0 %1550
        %1552 = vrot.lane.b32.xlu0 %v1549, 96
        %v1553 = vpop.permute.xlu0 %1552
        %vm1554 = vcmp.lt.s32.totalorder %v407, 96
        %v1555 = vsel %vm1554, %v1551, %v1553
        %v1556 = vsel %vm1554, %v1553, %v1551
        %v1557 = vrot.slane %v1130, 4
        %v1558 = vrot.slane %v1131, 4
        %v1561 = vmul.f32 %v1555, %v1557
        %v1562 = vmul.f32 %v1556, %v1558
        %v1563 = vadd.f32 %v1502, %v1561
        %v1564 = vadd.f32 %v1503, %v1562
        %s1565 = sld [smem:[#allocation6 + $0x2a]]
        %v1566 = vstv %s1565
        %v1567 = vmul.f32 %v1139, %v1566
        %v1568 = vmul.f32 %v1140, %v1566
        %s1569 = sld [smem:[#allocation6 + $0x2b]]
        %v1570 = vstv %s1569
        %v1571 = vmul.f32 %v1154, %v1570
        %v1572 = vmul.f32 %v1155, %v1570
        %v1573 = vadd.f32 %v1567, %v1571
        %v1574 = vadd.f32 %v1568, %v1572
        %s1575 = sld [smem:[#allocation6 + $0x2c]]
        %v1576 = vstv %s1575
        %v1577 = vmul.f32 %v1167, %v1576
        %v1578 = vmul.f32 %v1168, %v1576
        %v1579 = vadd.f32 %v1573, %v1577
        %v1580 = vadd.f32 %v1574, %v1578
        %s1581 = sld [smem:[#allocation6 + $0x2d]]
        %v1582 = vstv %s1581
        %v1583 = vmul.f32 %v1169, %v1582
        %v1584 = vmul.f32 %v1170, %v1582
        %v1587 = vrot.slane %v1583, 3
        %v1588 = vrot.slane %v1584, 3
        %v1591 = vadd.f32 %v1579, %v1587
        %v1592 = vadd.f32 %v1580, %v1588
        %s1593 = sld [smem:[#allocation6 + $0x2e]]
        %v1594 = vstv %s1593
        %v1595 = vmul.f32 %v1182, %v1594
        %v1596 = vmul.f32 %v1183, %v1594
        %v1597 = vadd.f32 %v1591, %v1595
        %v1598 = vadd.f32 %v1592, %v1596
        %s1599 = sld [smem:[#allocation6 + $0x2f]]
        %v1600 = vstv %s1599
        %v1601 = vmul.f32 %v1195, %v1600
        %v1602 = vmul.f32 %v1196, %v1600
        %v1603 = vadd.f32 %v1597, %v1601
        %v1604 = vadd.f32 %v1598, %v1602
        %s1605 = sld [smem:[#allocation6 + $0x30]]
        %v1606 = vstv %s1605
        %v1607 = vmul.f32 %v1208, %v1606
        %v1608 = vmul.f32 %v1209, %v1606
        %v1609 = vadd.f32 %v1603, %v1607
        %v1610 = vadd.f32 %v1604, %v1608
        %1611 = vrot.lane.b32.xlu0 %v1609, 80
        %v1612 = vpop.permute.xlu0 %1611
        %1613 = vrot.lane.b32.xlu0 %v1610, 80
        %v1614 = vpop.permute.xlu0 %1613
        %vm1615 = vcmp.lt.s32.totalorder %v407, 80
        %v1616 = vsel %vm1615, %v1612, %v1614
        %v1617 = vsel %vm1615, %v1614, %v1612
        %v1618 = vrot.slane %v1130, 5
        %v1619 = vrot.slane %v1131, 5
        %v1622 = vmul.f32 %v1616, %v1618
        %v1623 = vmul.f32 %v1617, %v1619
        %v1624 = vadd.f32 %v1563, %v1622
        %v1625 = vadd.f32 %v1564, %v1623
        %1626 = vrot.lane.b32.xlu0 %v1118, 3
        %v1627 = vpop.permute.xlu0 %1626
        %1628 = vrot.lane.b32.xlu0 %v1127, 3
        %v1629 = vpop.permute.xlu0 %1628
        %v1630 = vsel %vm1136, %v1627, %v1629
        %v1631 = vsel %vm1136, %v1629, %v1627
        %v1632 = vmul.f32 %v1631, %v1128
        %v1633 = vmul.f32 %v1630, %v1129
        %1634 = vrot.lane.b32.xlu0 %v1118, 2
        %v1635 = vpop.permute.xlu0 %1634
        %1636 = vrot.lane.b32.xlu0 %v1127, 2
        %v1637 = vpop.permute.xlu0 %1636
        %v1638 = vsel %vm1145, %v1635, %v1637
        %v1639 = vsel %vm1145, %v1637, %v1635
        %v1640 = vmul.f32 %v1639, %v1150
        %v1641 = vmul.f32 %v1638, %v1151
        %1642 = vrot.lane.b32.xlu0 %v1118, 1
        %v1643 = vpop.permute.xlu0 %1642
        %1644 = vrot.lane.b32.xlu0 %v1127, 1
        %v1645 = vpop.permute.xlu0 %1644
        %v1646 = vsel %vm1160, %v1643, %v1645
        %v1647 = vsel %vm1160, %v1645, %v1643
        %v1648 = vmul.f32 %v1647, %v1163
        %v1649 = vmul.f32 %v1646, %v1164
        %v1650 = vmul.f32 %v1118, %v1128
        %v1651 = vmul.f32 %v1127, %v1129
        %1652 = vrot.lane.b32.xlu0 %v1118, 127
        %v1653 = vpop.permute.xlu0 %1652
        %1654 = vrot.lane.b32.xlu0 %v1127, 127
        %v1655 = vpop.permute.xlu0 %1654
        %v1656 = vsel %vm1175, %v1653, %v1655
        %v1657 = vsel %vm1175, %v1655, %v1653
        %v1658 = vmul.f32 %v1656, %v1178
        %v1659 = vmul.f32 %v1657, %v1179
        %1660 = vrot.lane.b32.xlu0 %v1118, 126
        %v1661 = vpop.permute.xlu0 %1660
        %1662 = vrot.lane.b32.xlu0 %v1127, 126
        %v1663 = vpop.permute.xlu0 %1662
        %v1664 = vsel %vm1188, %v1661, %v1663
        %v1665 = vsel %vm1188, %v1663, %v1661
        %v1666 = vmul.f32 %v1664, %v1191
        %v1667 = vmul.f32 %v1665, %v1192
        %1668 = vrot.lane.b32.xlu0 %v1118, 125
        %v1669 = vpop.permute.xlu0 %1668
        %1670 = vrot.lane.b32.xlu0 %v1127, 125
        %v1671 = vpop.permute.xlu0 %1670
        %v1672 = vsel %vm1201, %v1669, %v1671
        %v1673 = vsel %vm1201, %v1671, %v1669
        %v1674 = vmul.f32 %v1672, %v1204
        %v1675 = vmul.f32 %v1673, %v1205
        %s1676 = sld [smem:[#allocation6 + $0x31]]
        %v1677 = vstv %s1676
        %v1678 = vmul.f32 %v1632, %v1677
        %v1679 = vmul.f32 %v1633, %v1677
        %s1680 = sld [smem:[#allocation6 + $0x32]]
        %v1681 = vstv %s1680
        %v1682 = vmul.f32 %v1640, %v1681
        %v1683 = vmul.f32 %v1641, %v1681
        %v1684 = vadd.f32 %v1678, %v1682
        %v1685 = vadd.f32 %v1679, %v1683
        %s1686 = sld [smem:[#allocation6 + $0x33]]
        %v1687 = vstv %s1686
        %v1688 = vmul.f32 %v1648, %v1687
        %v1689 = vmul.f32 %v1649, %v1687
        %v1690 = vadd.f32 %v1684, %v1688
        %v1691 = vadd.f32 %v1685, %v1689
        %s1692 = sld [smem:[#allocation6 + $0x34]]
        %v1693 = vstv %s1692
        %v1694 = vmul.f32 %v1650, %v1693
        %v1695 = vmul.f32 %v1651, %v1693
        %v1698 = vrot.slane %v1694, 3
        %v1699 = vrot.slane %v1695, 3
        %v1702 = vadd.f32 %v1690, %v1698
        %v1703 = vadd.f32 %v1691, %v1699
        %s1704 = sld [smem:[#allocation6 + $0x35]]
        %v1705 = vstv %s1704
        %v1706 = vmul.f32 %v1658, %v1705
        %v1707 = vmul.f32 %v1659, %v1705
        %v1708 = vadd.f32 %v1702, %v1706
        %v1709 = vadd.f32 %v1703, %v1707
        %s1710 = sld [smem:[#allocation6 + $0x36]]
        %v1711 = vstv %s1710
        %v1712 = vmul.f32 %v1666, %v1711
        %v1713 = vmul.f32 %v1667, %v1711
        %v1714 = vadd.f32 %v1708, %v1712
        %v1715 = vadd.f32 %v1709, %v1713
        %s1716 = sld [smem:[#allocation6 + $0x37]]
        %v1717 = vstv %s1716
        %v1718 = vmul.f32 %v1674, %v1717
        %v1719 = vmul.f32 %v1675, %v1717
        %v1720 = vadd.f32 %v1714, %v1718
        %v1721 = vadd.f32 %v1715, %v1719
        %1722 = vrot.lane.b32.xlu0 %v1720, 48
        %v1723 = vpop.permute.xlu0 %1722
        %1724 = vrot.lane.b32.xlu0 %v1721, 48
        %v1725 = vpop.permute.xlu0 %1724
        %v1726 = vsel %vm1260, %v1723, %v1725
        %v1727 = vsel %vm1260, %v1725, %v1723
        %v1728 = vmul.f32 %v1727, %v1263
        %v1729 = vmul.f32 %v1726, %v1264
        %s1730 = sld [smem:[#allocation6 + $0x38]]
        %v1731 = vstv %s1730
        %v1732 = vmul.f32 %v1632, %v1731
        %v1733 = vmul.f32 %v1633, %v1731
        %s1734 = sld [smem:[#allocation6 + $0x39]]
        %v1735 = vstv %s1734
        %v1736 = vmul.f32 %v1640, %v1735
        %v1737 = vmul.f32 %v1641, %v1735
        %v1738 = vadd.f32 %v1732, %v1736
        %v1739 = vadd.f32 %v1733, %v1737
        %s1740 = sld [smem:[#allocation6 + $0x3a]]
        %v1741 = vstv %s1740
        %v1742 = vmul.f32 %v1648, %v1741
        %v1743 = vmul.f32 %v1649, %v1741
        %v1744 = vadd.f32 %v1738, %v1742
        %v1745 = vadd.f32 %v1739, %v1743
        %s1746 = sld [smem:[#allocation6 + $0x3b]]
        %v1747 = vstv %s1746
        %v1748 = vmul.f32 %v1650, %v1747
        %v1749 = vmul.f32 %v1651, %v1747
        %v1752 = vrot.slane %v1748, 3
        %v1753 = vrot.slane %v1749, 3
        %v1756 = vadd.f32 %v1744, %v1752
        %v1757 = vadd.f32 %v1745, %v1753
        %s1758 = sld [smem:[#allocation6 + $0x3c]]
        %v1759 = vstv %s1758
        %v1760 = vmul.f32 %v1658, %v1759
        %v1761 = vmul.f32 %v1659, %v1759
        %v1762 = vadd.f32 %v1756, %v1760
        %v1763 = vadd.f32 %v1757, %v1761
        %s1764 = sld [smem:[#allocation6 + $0x3d]]
        %v1765 = vstv %s1764
        %v1766 = vmul.f32 %v1666, %v1765
        %v1767 = vmul.f32 %v1667, %v1765
        %v1768 = vadd.f32 %v1762, %v1766
        %v1769 = vadd.f32 %v1763, %v1767
        %s1770 = sld [smem:[#allocation6 + $0x3e]]
        %v1771 = vstv %s1770
        %v1772 = vmul.f32 %v1674, %v1771
        %v1773 = vmul.f32 %v1675, %v1771
        %v1774 = vadd.f32 %v1768, %v1772
        %v1775 = vadd.f32 %v1769, %v1773
        %1776 = vrot.lane.b32.xlu0 %v1774, 32
        %v1777 = vpop.permute.xlu0 %1776
        %1778 = vrot.lane.b32.xlu0 %v1775, 32
        %v1779 = vpop.permute.xlu0 %1778
        %v1780 = vsel %vm1319, %v1777, %v1779
        %v1781 = vsel %vm1319, %v1779, %v1777
        %v1782 = vmul.f32 %v1781, %v1130
        %v1783 = vmul.f32 %v1780, %v1131
        %v1784 = vadd.f32 %v1728, %v1782
        %v1785 = vadd.f32 %v1729, %v1783
        %s1786 = sld [smem:[#allocation6 + $0x3f]]
        %v1787 = vstv %s1786
        %v1788 = vmul.f32 %v1632, %v1787
        %v1789 = vmul.f32 %v1633, %v1787
        %s1790 = sld [smem:[#allocation6 + $0x40]]
        %v1791 = vstv %s1790
        %v1792 = vmul.f32 %v1640, %v1791
        %v1793 = vmul.f32 %v1641, %v1791
        %v1794 = vadd.f32 %v1788, %v1792
        %v1795 = vadd.f32 %v1789, %v1793
        %s1796 = sld [smem:[#allocation6 + $0x41]]
        %v1797 = vstv %s1796
        %v1798 = vmul.f32 %v1648, %v1797
        %v1799 = vmul.f32 %v1649, %v1797
        %v1800 = vadd.f32 %v1794, %v1798
        %v1801 = vadd.f32 %v1795, %v1799
        %s1802 = sld [smem:[#allocation6 + $0x42]]
        %v1803 = vstv %s1802
        %v1804 = vmul.f32 %v1650, %v1803
        %v1805 = vmul.f32 %v1651, %v1803
        %v1808 = vrot.slane %v1804, 3
        %v1809 = vrot.slane %v1805, 3
        %v1812 = vadd.f32 %v1800, %v1808
        %v1813 = vadd.f32 %v1801, %v1809
        %s1814 = sld [smem:[#allocation6 + $0x43]]
        %v1815 = vstv %s1814
        %v1816 = vmul.f32 %v1658, %v1815
        %v1817 = vmul.f32 %v1659, %v1815
        %v1818 = vadd.f32 %v1812, %v1816
        %v1819 = vadd.f32 %v1813, %v1817
        %s1820 = sld [smem:[#allocation6 + $0x44]]
        %v1821 = vstv %s1820
        %v1822 = vmul.f32 %v1666, %v1821
        %v1823 = vmul.f32 %v1667, %v1821
        %v1824 = vadd.f32 %v1818, %v1822
        %v1825 = vadd.f32 %v1819, %v1823
        %s1826 = sld [smem:[#allocation6 + $0x45]]
        %v1827 = vstv %s1826
        %v1828 = vmul.f32 %v1674, %v1827
        %v1829 = vmul.f32 %v1675, %v1827
        %v1830 = vadd.f32 %v1824, %v1828
        %v1831 = vadd.f32 %v1825, %v1829
        %1832 = vrot.lane.b32.xlu0 %v1830, 16
        %v1833 = vpop.permute.xlu0 %1832
        %1834 = vrot.lane.b32.xlu0 %v1831, 16
        %v1835 = vpop.permute.xlu0 %1834
        %v1836 = vsel %vm1376, %v1833, %v1835
        %v1837 = vsel %vm1376, %v1835, %v1833
        %v1838 = vmul.f32 %v1837, %v1381
        %v1839 = vmul.f32 %v1836, %v1382
        %v1840 = vadd.f32 %v1784, %v1838
        %v1841 = vadd.f32 %v1785, %v1839
        %s1842 = sld [smem:[#allocation6 + $0x46]]
        %v1843 = vstv %s1842
        %v1844 = vmul.f32 %v1632, %v1843
        %v1845 = vmul.f32 %v1633, %v1843
        %s1846 = sld [smem:[#allocation6 + $0x47]]
        %v1847 = vstv %s1846
        %v1848 = vmul.f32 %v1640, %v1847
        %v1849 = vmul.f32 %v1641, %v1847
        %v1850 = vadd.f32 %v1844, %v1848
        %v1851 = vadd.f32 %v1845, %v1849
        %s1852 = sld [smem:[#allocation6 + $0x48]]
        %v1853 = vstv %s1852
        %v1854 = vmul.f32 %v1648, %v1853
        %v1855 = vmul.f32 %v1649, %v1853
        %v1856 = vadd.f32 %v1850, %v1854
        %v1857 = vadd.f32 %v1851, %v1855
        %s1858 = sld [smem:[#allocation6 + $0x49]]
        %v1859 = vstv %s1858
        %v1860 = vmul.f32 %v1650, %v1859
        %v1861 = vmul.f32 %v1651, %v1859
        %v1864 = vrot.slane %v1860, 3
        %v1865 = vrot.slane %v1861, 3
        %v1868 = vadd.f32 %v1856, %v1864
        %v1869 = vadd.f32 %v1857, %v1865
        %s1870 = sld [smem:[#allocation6 + $0x4a]]
        %v1871 = vstv %s1870
        %v1872 = vmul.f32 %v1658, %v1871
        %v1873 = vmul.f32 %v1659, %v1871
        %v1874 = vadd.f32 %v1868, %v1872
        %v1875 = vadd.f32 %v1869, %v1873
        %s1876 = sld [smem:[#allocation6 + $0x4b]]
        %v1877 = vstv %s1876
        %v1878 = vmul.f32 %v1666, %v1877
        %v1879 = vmul.f32 %v1667, %v1877
        %v1880 = vadd.f32 %v1874, %v1878
        %v1881 = vadd.f32 %v1875, %v1879
        %s1882 = sld [smem:[#allocation6 + $0x4c]]
        %v1883 = vstv %s1882
        %v1884 = vmul.f32 %v1674, %v1883
        %v1885 = vmul.f32 %v1675, %v1883
        %v1886 = vadd.f32 %v1880, %v1884
        %v1887 = vadd.f32 %v1881, %v1885
        %v1888 = vmul.f32 %v1886, %v1435
        %v1889 = vmul.f32 %v1887, %v1436
        %v1890 = vadd.f32 %v1840, %v1888
        %v1891 = vadd.f32 %v1841, %v1889
        %s1892 = sld [smem:[#allocation6 + $0x4d]]
        %v1893 = vstv %s1892
        %v1894 = vmul.f32 %v1632, %v1893
        %v1895 = vmul.f32 %v1633, %v1893
        %s1896 = sld [smem:[#allocation6 + $0x4e]]
        %v1897 = vstv %s1896
        %v1898 = vmul.f32 %v1640, %v1897
        %v1899 = vmul.f32 %v1641, %v1897
        %v1900 = vadd.f32 %v1894, %v1898
        %v1901 = vadd.f32 %v1895, %v1899
        %s1902 = sld [smem:[#allocation6 + $0x4f]]
        %v1903 = vstv %s1902
        %v1904 = vmul.f32 %v1648, %v1903
        %v1905 = vmul.f32 %v1649, %v1903
        %v1906 = vadd.f32 %v1900, %v1904
        %v1907 = vadd.f32 %v1901, %v1905
        %s1908 = sld [smem:[#allocation6 + $0x50]]
        %v1909 = vstv %s1908
        %v1910 = vmul.f32 %v1650, %v1909
        %v1911 = vmul.f32 %v1651, %v1909
        %v1914 = vrot.slane %v1910, 3
        %v1915 = vrot.slane %v1911, 3
        %v1918 = vadd.f32 %v1906, %v1914
        %v1919 = vadd.f32 %v1907, %v1915
        %s1920 = sld [smem:[#allocation6 + $0x51]]
        %v1921 = vstv %s1920
        %v1922 = vmul.f32 %v1658, %v1921
        %v1923 = vmul.f32 %v1659, %v1921
        %v1924 = vadd.f32 %v1918, %v1922
        %v1925 = vadd.f32 %v1919, %v1923
        %s1926 = sld [smem:[#allocation6 + $0x52]]
        %v1927 = vstv %s1926
        %v1928 = vmul.f32 %v1666, %v1927
        %v1929 = vmul.f32 %v1667, %v1927
        %v1930 = vadd.f32 %v1924, %v1928
        %v1931 = vadd.f32 %v1925, %v1929
        %s1932 = sld [smem:[#allocation6 + $0x53]]
        %v1933 = vstv %s1932
        %v1934 = vmul.f32 %v1674, %v1933
        %v1935 = vmul.f32 %v1675, %v1933
        %v1936 = vadd.f32 %v1930, %v1934
        %v1937 = vadd.f32 %v1931, %v1935
        %1938 = vrot.lane.b32.xlu0 %v1936, 112
        %v1939 = vpop.permute.xlu0 %1938
        %1940 = vrot.lane.b32.xlu0 %v1937, 112
        %v1941 = vpop.permute.xlu0 %1940
        %v1942 = vsel %vm1493, %v1939, %v1941
        %v1943 = vsel %vm1493, %v1941, %v1939
        %v1944 = vmul.f32 %v1942, %v1496
        %v1945 = vmul.f32 %v1943, %v1497
        %v1946 = vadd.f32 %v1890, %v1944
        %v1947 = vadd.f32 %v1891, %v1945
        %s1948 = sld [smem:[#allocation6 + $0x54]]
        %v1949 = vstv %s1948
        %v1950 = vmul.f32 %v1632, %v1949
        %v1951 = vmul.f32 %v1633, %v1949
        %s1952 = sld [smem:[#allocation6 + $0x55]]
        %v1953 = vstv %s1952
        %v1954 = vmul.f32 %v1640, %v1953
        %v1955 = vmul.f32 %v1641, %v1953
        %v1956 = vadd.f32 %v1950, %v1954
        %v1957 = vadd.f32 %v1951, %v1955
        %s1958 = sld [smem:[#allocation6 + $0x56]]
        %v1959 = vstv %s1958
        %v1960 = vmul.f32 %v1648, %v1959
        %v1961 = vmul.f32 %v1649, %v1959
        %v1962 = vadd.f32 %v1956, %v1960
        %v1963 = vadd.f32 %v1957, %v1961
        %s1964 = sld [smem:[#allocation6 + $0x57]]
        %v1965 = vstv %s1964
        %v1966 = vmul.f32 %v1650, %v1965
        %v1967 = vmul.f32 %v1651, %v1965
        %v1970 = vrot.slane %v1966, 3
        %v1971 = vrot.slane %v1967, 3
        %v1974 = vadd.f32 %v1962, %v1970
        %v1975 = vadd.f32 %v1963, %v1971
        %s1976 = sld [smem:[#allocation6 + $0x58]]
        %v1977 = vstv %s1976
        %v1978 = vmul.f32 %v1658, %v1977
        %v1979 = vmul.f32 %v1659, %v1977
        %v1980 = vadd.f32 %v1974, %v1978
        %v1981 = vadd.f32 %v1975, %v1979
        %s1982 = sld [smem:[#allocation6 + $0x59]]
        %v1983 = vstv %s1982
        %v1984 = vmul.f32 %v1666, %v1983
        %v1985 = vmul.f32 %v1667, %v1983
        %v1986 = vadd.f32 %v1980, %v1984
        %v1987 = vadd.f32 %v1981, %v1985
        %s1988 = sld [smem:[#allocation6 + $0x5a]]
        %v1989 = vstv %s1988
        %v1990 = vmul.f32 %v1674, %v1989
        %v1991 = vmul.f32 %v1675, %v1989
        %v1992 = vadd.f32 %v1986, %v1990
        %v1993 = vadd.f32 %v1987, %v1991
        %1994 = vrot.lane.b32.xlu0 %v1992, 96
        %v1995 = vpop.permute.xlu0 %1994
        %1996 = vrot.lane.b32.xlu0 %v1993, 96
        %v1997 = vpop.permute.xlu0 %1996
        %v1998 = vsel %vm1554, %v1995, %v1997
        %v1999 = vsel %vm1554, %v1997, %v1995
        %v2000 = vmul.f32 %v1998, %v1557
        %v2001 = vmul.f32 %v1999, %v1558
        %v2002 = vadd.f32 %v1946, %v2000
        %v2003 = vadd.f32 %v1947, %v2001
        %s2004 = sld [smem:[#allocation6 + $0x5b]]
        %v2005 = vstv %s2004
        %v2006 = vmul.f32 %v1632, %v2005
        %v2007 = vmul.f32 %v1633, %v2005
        %s2008 = sld [smem:[#allocation6 + $0x5c]]
        %v2009 = vstv %s2008
        %v2010 = vmul.f32 %v1640, %v2009
        %v2011 = vmul.f32 %v1641, %v2009
        %v2012 = vadd.f32 %v2006, %v2010
        %v2013 = vadd.f32 %v2007, %v2011
        %s2014 = sld [smem:[#allocation6 + $0x5d]]
        %v2015 = vstv %s2014
        %v2016 = vmul.f32 %v1648, %v2015
        %v2017 = vmul.f32 %v1649, %v2015
        %v2018 = vadd.f32 %v2012, %v2016
        %v2019 = vadd.f32 %v2013, %v2017
        %s2020 = sld [smem:[#allocation6 + $0x5e]]
        %v2021 = vstv %s2020
        %v2022 = vmul.f32 %v1650, %v2021
        %v2023 = vmul.f32 %v1651, %v2021
        %v2026 = vrot.slane %v2022, 3
        %v2027 = vrot.slane %v2023, 3
        %v2030 = vadd.f32 %v2018, %v2026
        %v2031 = vadd.f32 %v2019, %v2027
        %s2032 = sld [smem:[#allocation6 + $0x5f]]
        %v2033 = vstv %s2032
        %v2034 = vmul.f32 %v1658, %v2033
        %v2035 = vmul.f32 %v1659, %v2033
        %v2036 = vadd.f32 %v2030, %v2034
        %v2037 = vadd.f32 %v2031, %v2035
        %s2038 = sld [smem:[#allocation6 + $0x60]]
        %v2039 = vstv %s2038
        %v2040 = vmul.f32 %v1666, %v2039
        %v2041 = vmul.f32 %v1667, %v2039
        %v2042 = vadd.f32 %v2036, %v2040
        %v2043 = vadd.f32 %v2037, %v2041
        %s2044 = sld [smem:[#allocation6 + $0x61]]
        %v2045 = vstv %s2044
        %v2046 = vmul.f32 %v1674, %v2045
        %v2047 = vmul.f32 %v1675, %v2045
        %v2048 = vadd.f32 %v2042, %v2046
        %v2049 = vadd.f32 %v2043, %v2047
        %2050 = vrot.lane.b32.xlu0 %v2048, 80
        %v2051 = vpop.permute.xlu0 %2050
        %2052 = vrot.lane.b32.xlu0 %v2049, 80
        %v2053 = vpop.permute.xlu0 %2052
        %v2054 = vsel %vm1615, %v2051, %v2053
        %v2055 = vsel %vm1615, %v2053, %v2051
        %v2056 = vmul.f32 %v2054, %v1618
        %v2057 = vmul.f32 %v2055, %v1619
        %v2058 = vadd.f32 %v2002, %v2056
        %v2059 = vadd.f32 %v2003, %v2057
        %v2060 = vadd.f32 %v1624, %v2058
        %v2061 = vadd.f32 %v1625, %v2059
        %v2062 = vxor.u32 %v2060, 2147483648
        %v2063 = vxor.u32 %v2061, 2147483648
        %v2064 = vmul.f32 %v2062, 1.442695
        %v2065 = vpow.pop %v2064
        %v2066 = vmul.f32 %v2063, 1.442695
        %v2067 = vpow.pop %v2066
        %v2068 = vadd.f32 %v2065, 1.0
        %v2069 = vadd.f32 %v2067, 1.0
        %v2070 = vrcp.pop %v2068
        %v2071 = vmul.f32 %v2068, %v2070
        %v2072 = vsub.f32 1.0, %v2071
        %v2073 = vmul.f32 %v2070, %v2072
        %v2074 = vadd.f32 %v2070, %v2073
        %vm2075 = vweird.f32 %v2068
        %vm2076 = vweird.f32 %v2070
        %vm2077 = vmor %vm2075, %vm2076
        %v2078 = vsel %vm2077, %v2070, %v2074
        %v2079 = vand.u32 2147483647, %v2068
        %vm2080 = vcmp.eq.f32.partialorder %v2079, 8.507059e+37
        %v2081 = vand.u32 %v2068, 2147483648
        %v2082 = vor.u32 1.1754944e-38, %v2081
        %v2083 = vsel %vm2080, %v2082, %v2078
        %v2084 = vmul.f32 1.0, %v2083
        %v2085 = vrcp.pop %v2069
        %v2086 = vmul.f32 %v2069, %v2085
        %v2087 = vsub.f32 1.0, %v2086
        %v2088 = vmul.f32 %v2085, %v2087
        %v2089 = vadd.f32 %v2085, %v2088
        %vm2090 = vweird.f32 %v2069
        %vm2091 = vweird.f32 %v2085
        %vm2092 = vmor %vm2090, %vm2091
        %v2093 = vsel %vm2092, %v2085, %v2089
        %v2094 = vand.u32 2147483647, %v2069
        %vm2095 = vcmp.eq.f32.partialorder %v2094, 8.507059e+37
        %v2096 = vand.u32 %v2069, 2147483648
        %v2097 = vor.u32 1.1754944e-38, %v2096
        %v2098 = vsel %vm2095, %v2097, %v2093
        %v2099 = vmul.f32 1.0, %v2098
        %v2100 = vperm.slane %v2084, 0
        %v2101 = vperm.slane %v2099, 0
        %v2102 = vmul.f32 %v1075, %v2100
        %v2103 = vmul.f32 %v1076, %v2101
        %v2104 = vmul.f32 %v1077, %v2100
        %v2105 = vmul.f32 %v1078, %v2101
        %v2106 = vmul.f32 %v1079, %v2100
        %v2107 = vmul.f32 %v1080, %v2101
        %v2108 = vmul.f32 %v1081, %v2100
        %v2109 = vmul.f32 %v1082, %v2101
        %2110 = vst [vmem:[%s258] sm:$0xff] %v2102
        %2111 = vst [vmem:[%s258 + $0x8] sm:$0xff] %v2103
        %2112 = vst [vmem:[%s258 + $0x10] sm:$0xff] %v2104
        %2113 = vst [vmem:[%s258 + $0x18] sm:$0xff] %v2105
        %2114 = vst [vmem:[%s258 + $0x20] sm:$0xff] %v2106
        %2115 = vst [vmem:[%s258 + $0x28] sm:$0xff] %v2107
        %2116 = vst [vmem:[%s258 + $0x30] sm:$0xff] %v2108
        %2117 = vst [vmem:[%s258 + $0x38] sm:$0xff] %v2109
        %s2118 = sand.u32 %s141, 1
        %s2119 = scalar_lea.sflag [#allocation4], %s2118
        %s2120 = sand.u32 %s141, 1
        %s2121 = smul.addr %s2120, 64
        %s2122 = scalar_lea.vmem [#allocation7], %s2121
        // Predicated region
        $region49: #{tpu_custom_call.1} parent=39 // pred_check
          %p2123 = pneg %p151
        $region50: #{tpu_custom_call.1} parent=39 // pred_check_branch
          %2125 = sbr.rel (%p2123) target = $region52
        $region51: #{tpu_custom_call.1} parent=39 // pred_region
          %2127 = vsyncadd %s2119, 0
          %s2128 = smul.addr %s23, 8
          %s2129 = smul.addr %s2128, 8
          %s2130 = scalar_lea.hbm %s5, %s2129
          %s2131 = sshll.u32 %s2122, 4
          %s2132 = int_to_ptr.vmem [resolvable:$true] %s2131
          %s2133 = sshll.u32 %s2130, 4
          %s2134 = int_to_ptr.hbm [resolvable:$true] %s2133
          %2139 = dma.vmem_to_hbm [thread:$0]  %s2132, 1024, %s2134, %s2119, 256, 256, 16
        $region52: #{tpu_custom_call.1} parent=39 // pred_fallthru
          _
      $region40: #{tpu_custom_call.1} parent=5 // pred_fallthru
        _
      %p2140 = scmp.le.s32.totalorder 2, %s18
      // Predicated region
      $region53: #{tpu_custom_call.1} parent=5 // pred_check
        %p2141 = pneg %p2140
      $region54: #{tpu_custom_call.1} parent=5 // pred_check_branch
        %2143 = sbr.rel (%p2141) target = $region56
      $region55: #{tpu_custom_call.1} parent=5 // pred_region
        %s2144 = ssub.s32 %s18, 2
        // Predicated region
        $region57: #{tpu_custom_call.1} parent=55 // pred_check
          %p2145 = pneg %p157
        $region58: #{tpu_custom_call.1} parent=55 // pred_check_branch
          %2147 = sbr.rel (%p2145) target = $region60
        $region59: #{tpu_custom_call.1} parent=55 // pred_region
          %s2148 = sand.u32 %s142, 1
          %s2149 = scalar_lea.sflag [#allocation4], %s2148
          %s2150 = sand.u32 %s142, 1
          %s2151 = smul.addr %s2150, 64
          %s2152 = scalar_lea.vmem [#allocation7], %s2151
          %2154 = dma.done %s2149, 1024
        $region60: #{tpu_custom_call.1} parent=55 // pred_fallthru
          _
      $region56: #{tpu_custom_call.1} parent=5 // pred_fallthru
        _
    $region6: #{tpu_custom_call.1} parent=1 // loop_footer
      %s22 = sadd.s32 1, %s18
    $region7: #{tpu_custom_call.1} parent=1 // loop_footer_branch
      %17 = sbr.rel target = $region3
    $region8: #{tpu_custom_call.1} parent=1 // loop_exit
      _
    %2155 = vsyncpa [#allocation3], 1
    %s2156 = scalar_lea.sflag [#allocation3], 1
    %2157 = vsyncpa %s2156, 1
    %2158 = vsyncpa [#allocation4], 1
    %s2159 = scalar_lea.sflag [#allocation4], 1
    %2160 = vsyncpa %s2159, 1
    %2161 = vsyncpa [#allocation5], 1
    %s2162 = scalar_lea.sflag [#allocation5], 1
    %2163 = vsyncpa %s2162, 1

</llo_original>
